<compile_context>
chip_gen: v6e
topology: v6e:2x2x1
jax: 0.10.0
libtpu: 0.0.40
codegen_flags: <defaults>
</compile_context>

<pallas_src>
import functools
import math

import jax
import jax.numpy as jnp
from jax import lax
from jax.experimental import pallas as pl
from jax.experimental.pallas import tpu as pltpu


def _lane_pad(c):
    return ((c + 127) // 128) * 128


def _vmem_limit_bytes():
    cap = 128 * 1024 * 1024
    try:
        cap = int(pltpu.get_tpu_info().vmem_capacity_bytes)
    except Exception:
        pass
    return min((cap * 3) // 4, 100 * 1024 * 1024)


def _pick_tile_h(H, W, Cin, Cout, r, budget_bytes, max_th=32):
    """Largest divisor of H (<= max_th) whose TH-dependent VMEM buffers fit."""
    C = Cout // (r * r)
    best = 1
    for th in range(1, min(H, max_th) + 1):
        if H % th:
            continue
        acc = th * W * _lane_pad(Cout) * 4                    # f32 VMEM accumulator
        slab = (th + 2) * W * _lane_pad(3 * Cin) * 2          # bf16 im2col slab
        outb = 2 * th * r * W * _lane_pad(r * C) * 2          # double-buffered out block
        if acc + slab + outb <= budget_bytes:
            best = th
    return best


def _shuffle_perm(C, r):
    # New conv-output channel k = i*(r*C) + j*C + c holds PyTorch conv channel
    # c*r*r + i*r + j, so PixelShuffle becomes contiguous channel slices.
    perm = []
    for i in range(r):
        for j in range(r):
            for c in range(C):
                perm.append(c * r * r + i * r + j)
    return jnp.array(perm, jnp.int32)


def _make_conv_ps_kernel(H, W, Cin, Cout, TH, r):
    C = Cout // (r * r)
    rC = r * C
    K = 3 * Cin

    def kernel(x_ref, w_ref, b_ref, a_ref, o_ref, slab_ref, acc_ref):
        # x_ref:    (H, W, Cin)        bf16 whole image (resident across h axis)
        # w_ref:    (3, 3*Cin, Cout)   bf16 dx-folded weights
        # b_ref:    (1, Cout)          f32 bias
        # a_ref:    (1,)               f32 PReLU slope (SMEM)
        # o_ref:    (TH, r, W, r*C)    bf16; free-reshapes to pixel-shuffled out
        # slab_ref: (TH+2, W, 3*Cin)   bf16 im2col(dx) slab with 1-row halo
        # acc_ref:  (TH*W, Cout)       f32 accumulator
        h = pl.program_id(1)
        nh = pl.num_programs(1)

        def write_rows(dst, src, n):
            # slab rows [dst, dst+n) <- image rows [src, src+n), all 3 dx taps.
            rows = x_ref[pl.ds(src, n)]                                   # (n, W, Cin)
            slab_ref[dst:dst + n, :, Cin:2 * Cin] = rows                  # dx = 1
            slab_ref[dst:dst + n, 1:, 0:Cin] = rows[:, :W - 1, :]         # dx = 0
            slab_ref[dst:dst + n, :W - 1, 2 * Cin:] = rows[:, 1:, :]      # dx = 2

        def zero_row(dst):
            slab_ref[dst:dst + 1] = jnp.zeros((1, W, K), slab_ref.dtype)

        # Interior rows of the tile (always in bounds).
        write_rows(1, pl.multiple_of(h * TH, TH), TH)

        # Top halo row (image row h*TH - 1).
        @pl.when(h > 0)
        def _():
            write_rows(0, h * TH - 1, 1)

        @pl.when(h == 0)
        def _():
            zero_row(0)

        # Bottom halo row (image row (h+1)*TH).
        @pl.when(h < nh - 1)
        def _():
            write_rows(TH + 1, (h + 1) * TH, 1)

        @pl.when(h == nh - 1)
        def _():
            zero_row(TH + 1)

        # Seam columns the data writes never touch must stay zero (scratch
        # starts uninitialized): left tap at x=0, right tap at x=W-1.
        zcol = jnp.zeros((TH + 2, 1, Cin), slab_ref.dtype)
        slab_ref[:, 0:1, 0:Cin] = zcol
        slab_ref[:, W - 1:W, 2 * Cin:] = zcol

        # 3 dy matmuls with K = 3*Cin, accumulated in the VMEM scratch
        # (chained += keeps the accumulation MRB-friendly on v7x).
        acc_ref[...] = jnp.dot(slab_ref[0:TH].reshape(TH * W, K), w_ref[0],
                               preferred_element_type=jnp.float32)
        acc_ref[...] += jnp.dot(slab_ref[1:TH + 1].reshape(TH * W, K), w_ref[1],
                                preferred_element_type=jnp.float32)
        acc_ref[...] += jnp.dot(slab_ref[2:TH + 2].reshape(TH * W, K), w_ref[2],
                                preferred_element_type=jnp.float32)

        # Bias + PReLU + fused PixelShuffle store: channel order was permuted
        # to k = i*(r*C) + j*C + c, so sub-row i is one contiguous lane slice
        # and the wrapper-side depth_to_space is a pure metadata reshape.
        alpha = a_ref[0]
        for i in range(r):
            lo = i * rC
            part = acc_ref[:, lo:lo + rC] + b_ref[:, lo:lo + rC]
            part = jnp.where(part >= 0, part, alpha * part)
            o_ref[:, i, :, :] = part.astype(o_ref.dtype).reshape(TH, W, rC)

    return kernel


def conv3x3_prelu_pixelshuffle(x_nhwc, w, b, alpha, r, *, tile_h=None):
    """Fused Conv2d(3x3, s=1, p=1) + PReLU + PixelShuffle(r).  NHWC in/out.

    x_nhwc: (N, H, W, C); w: (3, 3, C, r*r*C) with cout in PyTorch order;
    b: (r*r*C,); alpha scalar.  Returns (N, H*r, W*r, C) bfloat16.
    """
    N, H, W, Cin = x_nhwc.shape
    Cout = w.shape[-1]
    C = Cout // (r * r)
    assert C * r * r == Cout and C == Cin, (Cin, Cout, r)

    x_bf = x_nhwc.astype(jnp.bfloat16)

    vmem_limit = _vmem_limit_bytes()
    img_bytes = 2 * H * W * _lane_pad(Cin) * 2        # double-buffered resident image
    budget = max(1 << 20, (vmem_limit - img_bytes) // 4)
    TH = tile_h if tile_h is not None else _pick_tile_h(H, W, Cin, Cout, r, budget)
    assert H % TH == 0, (H, TH)

    perm = _shuffle_perm(C, r)
    w_f = w[..., perm].astype(jnp.bfloat16).reshape(3, 3 * Cin, Cout)  # dx folded into K
    b_f = b[perm].reshape(1, Cout).astype(jnp.float32)
    a1 = jnp.asarray(alpha, jnp.float32).reshape(1)

    cost = pl.CostEstimate(
        flops=2 * 9 * N * H * W * Cin * Cout,
        transcendentals=0,
        bytes_accessed=(N * H * W * Cin * 2 + 9 * Cin * Cout * 2 + Cout * 4
                        + N * H * W * Cout * 2))

    out5 = pl.pallas_call(
        _make_conv_ps_kernel(H, W, Cin, Cout, TH, r),
        out_shape=jax.ShapeDtypeStruct((N, H, r, W, r * C), jnp.bfloat16),
        grid_spec=pltpu.PrefetchScalarGridSpec(
            num_scalar_prefetch=0,
            grid=(N, H // TH),
            in_specs=[
                # Whole image per batch element, resident across the h axis.
                pl.BlockSpec((None, H, W, Cin), lambda n, h: (n, 0, 0, 0)),
                pl.BlockSpec((3, 3 * Cin, Cout), lambda n, h: (0, 0, 0)),
                pl.BlockSpec((1, Cout), lambda n, h: (0, 0)),
                pl.BlockSpec(memory_space=pltpu.MemorySpace.SMEM),     # alpha
            ],
            out_specs=pl.BlockSpec((None, TH, r, W, r * C),
                                   lambda n, h: (n, h, 0, 0, 0)),
            scratch_shapes=[
                pltpu.VMEM((TH + 2, W, 3 * Cin), jnp.bfloat16),   # im2col(dx) slab
                pltpu.VMEM((TH * W, Cout), jnp.float32),          # f32 accumulator
            ]),
        compiler_params=pltpu.CompilerParams(
            dimension_semantics=("parallel", "arbitrary"),
            vmem_limit_bytes=vmem_limit),
        cost_estimate=cost,
    )(x_bf, w_f, b_f, a1)

    # depth_to_space is now a pure metadata reshape (no extra HBM round trip).
    return out5.reshape(N, H * r, W * r, C)


def upsample_block(x_nchw, params, r, *, tile_h=None):
    """Forward pass of _UpsampleBlock.  x_nchw: (N, C, H, W) float32."""
    out = jnp.transpose(x_nchw, (0, 2, 3, 1)).astype(jnp.bfloat16)  # NCHW->NHWC + bf16
    for (w, b, a) in params:
        out = conv3x3_prelu_pixelshuffle(out, w, b, a, r, tile_h=tile_h)
    return jnp.transpose(out, (0, 3, 1, 2)).astype(jnp.float32)     # back to NCHW


def make_params(key, n_channels, scale):
    """Deterministic parameter init (shapes as in _UpsampleBlock.__init__)."""
    if scale in (2, 4, 8):
        n_stages, r = int(math.log(scale, 2)), 2
    elif scale == 3:
        n_stages, r = 1, 3
    else:
        raise ValueError("scale must be in {2, 3, 4, 8}")
    params = []
    for _ in range(n_stages):
        key, kw, kb = jax.random.split(key, 3)
        cout = r * r * n_channels
        # (kh, kw, cin, cout) with cout in PyTorch's (cout, cin, kh, kw) channel order.
        w = 0.1 * jax.random.normal(kw, (3, 3, n_channels, cout), jnp.float32)
        b = 0.1 * jax.random.normal(kb, (cout,), jnp.float32)
        a = jnp.float32(0.25)  # nn.PReLU() default init
        params.append((w, b, a))
    return params, r


def _pixel_shuffle_nchw(x, r):
    """Exact PyTorch nn.PixelShuffle semantics on NCHW input (reference only)."""
    N, Crr, H, W = x.shape
    C = Crr // (r * r)
    x = x.reshape(N, C, r, r, H, W)
    x = x.transpose(0, 1, 4, 2, 5, 3)
    return x.reshape(N, C, H * r, W * r)


def _reference_upsample_block(x_nchw, params, r):
    """Pure-JAX f32 reference (lax conv) for correctness checking."""
    out = x_nchw
    for (w, b, a) in params:
        w_oihw = jnp.transpose(w, (3, 2, 0, 1))  # (cout, cin, kh, kw)
        y = lax.conv_general_dilated(
            out, w_oihw, window_strides=(1, 1), padding=((1, 1), (1, 1)),
            dimension_numbers=("NCHW", "OIHW", "NCHW"))
        y = y + b.reshape(1, -1, 1, 1)
        y = jnp.where(y >= 0, y, a * y)
        out = _pixel_shuffle_nchw(y, r)
    return out


if __name__ == "__main__":
    key = jax.random.PRNGKey(0)
    k_x, k_p = jax.random.split(key)

    N, C, H, W = 2, 4, 16, 16
    x = jax.random.normal(k_x, (N, C, H, W), jnp.float32)

    # tile_h=8 exercises the (N, H-tiles) grid and the halo handling even at
    # this toy resolution (H=16 -> 2 row tiles per image at stage 1).
    for scale in (2, 3, 4):
        params, r = make_params(k_p, C, scale)
        fwd = jax.jit(functools.partial(upsample_block, params=params, r=r,
                                        tile_h=8))
        out = jax.block_until_ready(fwd(x))
        assert out.shape == (N, C, H * scale, W * scale), out.shape

        ref = _reference_upsample_block(x, params, r)
        max_err = float(jnp.max(jnp.abs(out - ref)))
        # bf16 operands / activations -> looser tolerance than the f32 reference.
        assert jnp.allclose(out, ref, atol=5e-2, rtol=5e-2), (scale, max_err)

    print("KERNEL_OK")
</pallas_src>

<mosaic_0001>
module attributes {stable_mosaic.version = 11 : i64} {
  func.func @kernel(%arg0: i32, %arg1: i32, %arg2: memref<1x16x16x4xbf16, #tpu.memory_space<vmem>>, %arg3: memref<3x12x16xbf16, #tpu.memory_space<vmem>>, %arg4: memref<1x16xf32, #tpu.memory_space<vmem>>, %arg5: memref<1xf32, #tpu.memory_space<smem>>, %arg6: memref<1x8x2x16x8xbf16, #tpu.memory_space<vmem>>, %arg7: memref<10x16x12xbf16, #tpu.memory_space<vmem>>, %arg8: memref<128x16xf32, #tpu.memory_space<vmem>>) attributes {dimension_semantics = [#tpu.dimension_semantics<parallel>, #tpu.dimension_semantics<arbitrary>], iteration_bounds = array<i64: 2, 2>, scalar_prefetch = 0 : i64, scratch_operands = 2 : i64, tpu.core_type = #tpu.core_type<tc>, window_params = [{transform_indices = @transform_0, window_bounds = array<i64: 1, 16, 16, 4>}, {pipeline_mode = #tpu.pipeline_mode<synchronous>, transform_indices = @transform_1, window_bounds = array<i64: 3, 12, 16>}, {pipeline_mode = #tpu.pipeline_mode<synchronous>, transform_indices = @transform_2, window_bounds = array<i64: 1, 16>}, {transform_indices = @transform_3, window_bounds = array<i64: 1>}, {transform_indices = @transform_4, window_bounds = array<i64: 1, 8, 2, 16, 8>}]} {
    %c8_i32 = arith.constant 8 : i32
    %0 = arith.muli %arg1, %c8_i32 : i32
    %1 = tpu.assume_multiple %0, 8 : i32
    %c0 = arith.constant 0 : index
    %2 = arith.index_cast %1 : i32 to index
    %c0_0 = arith.constant 0 : index
    %c0_1 = arith.constant 0 : index
    %3 = vector.load %arg2[%c0, %2, %c0_0, %c0_1] : memref<1x16x16x4xbf16, #tpu.memory_space<vmem>>, vector<1x8x16x4xbf16>
    %4 = vector.shape_cast %3 : vector<1x8x16x4xbf16> to vector<8x16x4xbf16>
    %c1 = arith.constant 1 : index
    %c0_2 = arith.constant 0 : index
    %c4 = arith.constant 4 : index
    %5 = vector.load %arg7[%c1, %c0_2, %c4] : memref<10x16x12xbf16, #tpu.memory_space<vmem>>, vector<8x16x4xbf16>
    tpu.vector_store %arg7[%c1, %c0_2, %c4], %4 {strides = array<i32>} : memref<10x16x12xbf16, #tpu.memory_space<vmem>>, vector<8x16x4xbf16>,
    %6 = vector.extract_strided_slice %4 {offsets = [0, 0, 0], sizes = [8, 15, 4], strides = [1, 1, 1]} : vector<8x16x4xbf16> to vector<8x15x4xbf16>
    %c1_3 = arith.constant 1 : index
    %c1_4 = arith.constant 1 : index
    %c0_5 = arith.constant 0 : index
    %7 = vector.load %arg7[%c1_3, %c1_4, %c0_5] : memref<10x16x12xbf16, #tpu.memory_space<vmem>>, vector<8x15x4xbf16>
    tpu.vector_store %arg7[%c1_3, %c1_4, %c0_5], %6 {strides = array<i32>} : memref<10x16x12xbf16, #tpu.memory_space<vmem>>, vector<8x15x4xbf16>,
    %8 = vector.extract_strided_slice %4 {offsets = [0, 1, 0], sizes = [8, 15, 4], strides = [1, 1, 1]} : vector<8x16x4xbf16> to vector<8x15x4xbf16>
    %c1_6 = arith.constant 1 : index
    %c0_7 = arith.constant 0 : index
    %c8 = arith.constant 8 : index
    %9 = vector.load %arg7[%c1_6, %c0_7, %c8] : memref<10x16x12xbf16, #tpu.memory_space<vmem>>, vector<8x15x4xbf16>
    tpu.vector_store %arg7[%c1_6, %c0_7, %c8], %8 {strides = array<i32>} : memref<10x16x12xbf16, #tpu.memory_space<vmem>>, vector<8x15x4xbf16>,
    %c0_i32 = arith.constant 0 : i32
    %10 = arith.cmpi sgt, %arg1, %c0_i32 : i32
    %11 = arith.extui %10 : i1 to i32
    %c0_i32_8 = arith.constant 0 : i32
    %12 = arith.cmpi ne, %11, %c0_i32_8 : i32
    scf.if %12 {
      %c8_i32_70 = arith.constant 8 : i32
      %76 = arith.muli %arg1, %c8_i32_70 : i32
      %c1_i32_71 = arith.constant 1 : i32
      %77 = arith.subi %76, %c1_i32_71 : i32
      %c0_72 = arith.constant 0 : index
      %78 = arith.index_cast %77 : i32 to index
      %c0_73 = arith.constant 0 : index
      %c0_74 = arith.constant 0 : index
      %79 = vector.load %arg2[%c0_72, %78, %c0_73, %c0_74] : memref<1x16x16x4xbf16, #tpu.memory_space<vmem>>, vector<1x1x16x4xbf16>
      %80 = vector.shape_cast %79 : vector<1x1x16x4xbf16> to vector<1x16x4xbf16>
      %c0_75 = arith.constant 0 : index
      %c0_76 = arith.constant 0 : index
      %c4_77 = arith.constant 4 : index
      %81 = vector.load %arg7[%c0_75, %c0_76, %c4_77] : memref<10x16x12xbf16, #tpu.memory_space<vmem>>, vector<1x16x4xbf16>
      tpu.vector_store %arg7[%c0_75, %c0_76, %c4_77], %80 {strides = array<i32>} : memref<10x16x12xbf16, #tpu.memory_space<vmem>>, vector<1x16x4xbf16>,
      %82 = vector.extract_strided_slice %80 {offsets = [0, 0, 0], sizes = [1, 15, 4], strides = [1, 1, 1]} : vector<1x16x4xbf16> to vector<1x15x4xbf16>
      %c0_78 = arith.constant 0 : index
      %c1_79 = arith.constant 1 : index
      %c0_80 = arith.constant 0 : index
      %83 = vector.load %arg7[%c0_78, %c1_79, %c0_80] : memref<10x16x12xbf16, #tpu.memory_space<vmem>>, vector<1x15x4xbf16>
      tpu.vector_store %arg7[%c0_78, %c1_79, %c0_80], %82 {strides = array<i32>} : memref<10x16x12xbf16, #tpu.memory_space<vmem>>, vector<1x15x4xbf16>,
      %84 = vector.extract_strided_slice %80 {offsets = [0, 1, 0], sizes = [1, 15, 4], strides = [1, 1, 1]} : vector<1x16x4xbf16> to vector<1x15x4xbf16>
      %c0_81 = arith.constant 0 : index
      %c0_82 = arith.constant 0 : index
      %c8_83 = arith.constant 8 : index
      %85 = vector.load %arg7[%c0_81, %c0_82, %c8_83] : memref<10x16x12xbf16, #tpu.memory_space<vmem>>, vector<1x15x4xbf16>
      tpu.vector_store %arg7[%c0_81, %c0_82, %c8_83], %84 {strides = array<i32>} : memref<10x16x12xbf16, #tpu.memory_space<vmem>>, vector<1x15x4xbf16>,
    } else {
    }
    %c0_i32_9 = arith.constant 0 : i32
    %13 = arith.cmpi eq, %arg1, %c0_i32_9 : i32
    %14 = arith.extui %13 : i1 to i32
    %c0_i32_10 = arith.constant 0 : i32
    %15 = arith.cmpi ne, %14, %c0_i32_10 : i32
    scf.if %15 {
      %cst_70 = arith.constant 0.000000e+00 : bf16
      %76 = vector.broadcast %cst_70 : bf16 to vector<1x16x12xbf16>
      %c0_71 = arith.constant 0 : index
      %c0_72 = arith.constant 0 : index
      %c0_73 = arith.constant 0 : index
      %77 = vector.load %arg7[%c0_71, %c0_72, %c0_73] : memref<10x16x12xbf16, #tpu.memory_space<vmem>>, vector<1x16x12xbf16>
      tpu.vector_store %arg7[%c0_71, %c0_72, %c0_73], %76 {strides = array<i32>} : memref<10x16x12xbf16, #tpu.memory_space<vmem>>, vector<1x16x12xbf16>,
    } else {
    }
    %c1_i32 = arith.constant 1 : i32
    %16 = arith.cmpi slt, %arg1, %c1_i32 : i32
    %17 = arith.extui %16 : i1 to i32
    %c0_i32_11 = arith.constant 0 : i32
    %18 = arith.cmpi ne, %17, %c0_i32_11 : i32
    scf.if %18 {
      %c1_i32_70 = arith.constant 1 : i32
      %76 = arith.addi %arg1, %c1_i32_70 : i32
      %c8_i32_71 = arith.constant 8 : i32
      %77 = arith.muli %76, %c8_i32_71 : i32
      %c0_72 = arith.constant 0 : index
      %78 = arith.index_cast %77 : i32 to index
      %c0_73 = arith.constant 0 : index
      %c0_74 = arith.constant 0 : index
      %79 = vector.load %arg2[%c0_72, %78, %c0_73, %c0_74] : memref<1x16x16x4xbf16, #tpu.memory_space<vmem>>, vector<1x1x16x4xbf16>
      %80 = vector.shape_cast %79 : vector<1x1x16x4xbf16> to vector<1x16x4xbf16>
      %c9 = arith.constant 9 : index
      %c0_75 = arith.constant 0 : index
      %c4_76 = arith.constant 4 : index
      %81 = vector.load %arg7[%c9, %c0_75, %c4_76] : memref<10x16x12xbf16, #tpu.memory_space<vmem>>, vector<1x16x4xbf16>
      tpu.vector_store %arg7[%c9, %c0_75, %c4_76], %80 {strides = array<i32>} : memref<10x16x12xbf16, #tpu.memory_space<vmem>>, vector<1x16x4xbf16>,
      %82 = vector.extract_strided_slice %80 {offsets = [0, 0, 0], sizes = [1, 15, 4], strides = [1, 1, 1]} : vector<1x16x4xbf16> to vector<1x15x4xbf16>
      %c9_77 = arith.constant 9 : index
      %c1_78 = arith.constant 1 : index
      %c0_79 = arith.constant 0 : index
      %83 = vector.load %arg7[%c9_77, %c1_78, %c0_79] : memref<10x16x12xbf16, #tpu.memory_space<vmem>>, vector<1x15x4xbf16>
      tpu.vector_store %arg7[%c9_77, %c1_78, %c0_79], %82 {strides = array<i32>} : memref<10x16x12xbf16, #tpu.memory_space<vmem>>, vector<1x15x4xbf16>,
      %84 = vector.extract_strided_slice %80 {offsets = [0, 1, 0], sizes = [1, 15, 4], strides = [1, 1, 1]} : vector<1x16x4xbf16> to vector<1x15x4xbf16>
      %c9_80 = arith.constant 9 : index
      %c0_81 = arith.constant 0 : index
      %c8_82 = arith.constant 8 : index
      %85 = vector.load %arg7[%c9_80, %c0_81, %c8_82] : memref<10x16x12xbf16, #tpu.memory_space<vmem>>, vector<1x15x4xbf16>
      tpu.vector_store %arg7[%c9_80, %c0_81, %c8_82], %84 {strides = array<i32>} : memref<10x16x12xbf16, #tpu.memory_space<vmem>>, vector<1x15x4xbf16>,
    } else {
    }
    %c1_i32_12 = arith.constant 1 : i32
    %19 = arith.cmpi eq, %arg1, %c1_i32_12 : i32
    %20 = arith.extui %19 : i1 to i32
    %c0_i32_13 = arith.constant 0 : i32
    %21 = arith.cmpi ne, %20, %c0_i32_13 : i32
    scf.if %21 {
      %cst_70 = arith.constant 0.000000e+00 : bf16
      %76 = vector.broadcast %cst_70 : bf16 to vector<1x16x12xbf16>
      %c9 = arith.constant 9 : index
      %c0_71 = arith.constant 0 : index
      %c0_72 = arith.constant 0 : index
      %77 = vector.load %arg7[%c9, %c0_71, %c0_72] : memref<10x16x12xbf16, #tpu.memory_space<vmem>>, vector<1x16x12xbf16>
      tpu.vector_store %arg7[%c9, %c0_71, %c0_72], %76 {strides = array<i32>} : memref<10x16x12xbf16, #tpu.memory_space<vmem>>, vector<1x16x12xbf16>,
    } else {
    }
    %cst = arith.constant 0.000000e+00 : bf16
    %22 = vector.broadcast %cst : bf16 to vector<10x1x4xbf16>
    %c0_14 = arith.constant 0 : index
    %c0_15 = arith.constant 0 : index
    %c0_16 = arith.constant 0 : index
    %23 = vector.load %arg7[%c0_14, %c0_15, %c0_16] : memref<10x16x12xbf16, #tpu.memory_space<vmem>>, vector<10x1x4xbf16>
    tpu.vector_store %arg7[%c0_14, %c0_15, %c0_16], %22 {strides = array<i32>} : memref<10x16x12xbf16, #tpu.memory_space<vmem>>, vector<10x1x4xbf16>,
    %c0_17 = arith.constant 0 : index
    %c15 = arith.constant 15 : index
    %c8_18 = arith.constant 8 : index
    %24 = vector.load %arg7[%c0_17, %c15, %c8_18] : memref<10x16x12xbf16, #tpu.memory_space<vmem>>, vector<10x1x4xbf16>
    tpu.vector_store %arg7[%c0_17, %c15, %c8_18], %22 {strides = array<i32>} : memref<10x16x12xbf16, #tpu.memory_space<vmem>>, vector<10x1x4xbf16>,
    %c0_19 = arith.constant 0 : index
    %c0_20 = arith.constant 0 : index
    %c0_21 = arith.constant 0 : index
    %25 = vector.load %arg7[%c0_19, %c0_20, %c0_21] : memref<10x16x12xbf16, #tpu.memory_space<vmem>>, vector<8x16x12xbf16>
    %26 = vector.shape_cast %25 : vector<8x16x12xbf16> to vector<128x12xbf16>
    %c0_22 = arith.constant 0 : index
    %c0_23 = arith.constant 0 : index
    %c0_24 = arith.constant 0 : index
    %27 = vector.load %arg3[%c0_22, %c0_23, %c0_24] : memref<3x12x16xbf16, #tpu.memory_space<vmem>>, vector<1x12x16xbf16>
    %28 = vector.shape_cast %27 : vector<1x12x16xbf16> to vector<12x16xbf16>
    %cst_25 = arith.constant dense<0.000000e+00> : vector<128x16xf32>
    %29 = tpu.matmul %26, %28, %cst_25 {dimension_numbers = #tpu.dot_dimension_numbers<[1], [0], [0], [1], [0, 0, 1, 1], [], []>} : vector<128x12xbf16>, vector<12x16xbf16>, vector<128x16xf32> -> vector<128x16xf32>
    %c0_26 = arith.constant 0 : index
    %c0_27 = arith.constant 0 : index
    %30 = vector.load %arg8[%c0_26, %c0_27] : memref<128x16xf32, #tpu.memory_space<vmem>>, vector<128x16xf32>
    tpu.vector_store %arg8[%c0_26, %c0_27], %29 {strides = array<i32>} : memref<128x16xf32, #tpu.memory_space<vmem>>, vector<128x16xf32>,
    %c0_28 = arith.constant 0 : index
    %c0_29 = arith.constant 0 : index
    %31 = vector.load %arg8[%c0_28, %c0_29] : memref<128x16xf32, #tpu.memory_space<vmem>>, vector<128x16xf32>
    %c1_30 = arith.constant 1 : index
    %c0_31 = arith.constant 0 : index
    %c0_32 = arith.constant 0 : index
    %32 = vector.load %arg7[%c1_30, %c0_31, %c0_32] : memref<10x16x12xbf16, #tpu.memory_space<vmem>>, vector<8x16x12xbf16>
    %33 = vector.shape_cast %32 : vector<8x16x12xbf16> to vector<128x12xbf16>
    %c1_33 = arith.constant 1 : index
    %c0_34 = arith.constant 0 : index
    %c0_35 = arith.constant 0 : index
    %34 = vector.load %arg3[%c1_33, %c0_34, %c0_35] : memref<3x12x16xbf16, #tpu.memory_space<vmem>>, vector<1x12x16xbf16>
    %35 = vector.shape_cast %34 : vector<1x12x16xbf16> to vector<12x16xbf16>
    %cst_36 = arith.constant dense<0.000000e+00> : vector<128x16xf32>
    %36 = tpu.matmul %33, %35, %cst_36 {dimension_numbers = #tpu.dot_dimension_numbers<[1], [0], [0], [1], [0, 0, 1, 1], [], []>} : vector<128x12xbf16>, vector<12x16xbf16>, vector<128x16xf32> -> vector<128x16xf32>
    %37 = arith.addf %31, %36 : vector<128x16xf32>
    %c0_37 = arith.constant 0 : index
    %c0_38 = arith.constant 0 : index
    %38 = vector.load %arg8[%c0_37, %c0_38] : memref<128x16xf32, #tpu.memory_space<vmem>>, vector<128x16xf32>
    tpu.vector_store %arg8[%c0_37, %c0_38], %37 {strides = array<i32>} : memref<128x16xf32, #tpu.memory_space<vmem>>, vector<128x16xf32>,
    %c0_39 = arith.constant 0 : index
    %c0_40 = arith.constant 0 : index
    %39 = vector.load %arg8[%c0_39, %c0_40] : memref<128x16xf32, #tpu.memory_space<vmem>>, vector<128x16xf32>
    %c2 = arith.constant 2 : index
    %c0_41 = arith.constant 0 : index
    %c0_42 = arith.constant 0 : index
    %40 = vector.load %arg7[%c2, %c0_41, %c0_42] : memref<10x16x12xbf16, #tpu.memory_space<vmem>>, vector<8x16x12xbf16>
    %41 = vector.shape_cast %40 : vector<8x16x12xbf16> to vector<128x12xbf16>
    %c2_43 = arith.constant 2 : index
    %c0_44 = arith.constant 0 : index
    %c0_45 = arith.constant 0 : index
    %42 = vector.load %arg3[%c2_43, %c0_44, %c0_45] : memref<3x12x16xbf16, #tpu.memory_space<vmem>>, vector<1x12x16xbf16>
    %43 = vector.shape_cast %42 : vector<1x12x16xbf16> to vector<12x16xbf16>
    %cst_46 = arith.constant dense<0.000000e+00> : vector<128x16xf32>
    %44 = tpu.matmul %41, %43, %cst_46 {dimension_numbers = #tpu.dot_dimension_numbers<[1], [0], [0], [1], [0, 0, 1, 1], [], []>} : vector<128x12xbf16>, vector<12x16xbf16>, vector<128x16xf32> -> vector<128x16xf32>
    %45 = arith.addf %39, %44 : vector<128x16xf32>
    %c0_47 = arith.constant 0 : index
    %c0_48 = arith.constant 0 : index
    %46 = vector.load %arg8[%c0_47, %c0_48] : memref<128x16xf32, #tpu.memory_space<vmem>>, vector<128x16xf32>
    tpu.vector_store %arg8[%c0_47, %c0_48], %45 {strides = array<i32>} : memref<128x16xf32, #tpu.memory_space<vmem>>, vector<128x16xf32>,
    %c0_49 = arith.constant 0 : index
    %47 = memref.load %arg5[%c0_49] : memref<1xf32, #tpu.memory_space<smem>>
    %c0_50 = arith.constant 0 : index
    %c0_51 = arith.constant 0 : index
    %48 = vector.load %arg8[%c0_50, %c0_51] : memref<128x16xf32, #tpu.memory_space<vmem>>, vector<128x8xf32>
    %c0_52 = arith.constant 0 : index
    %c0_53 = arith.constant 0 : index
    %49 = vector.load %arg4[%c0_52, %c0_53] : memref<1x16xf32, #tpu.memory_space<vmem>>, vector<1x8xf32>
    %50 = vector.broadcast %49 : vector<1x8xf32> to vector<128x8xf32>
    %51 = arith.addf %48, %50 : vector<128x8xf32>
    %cst_54 = arith.constant 0.000000e+00 : f32
    %52 = vector.broadcast %cst_54 : f32 to vector<128x8xf32>
    %53 = arith.cmpf oge, %51, %52 : vector<128x8xf32>
    %54 = vector.broadcast %47 : f32 to vector<128x8xf32>
    %55 = arith.mulf %54, %51 : vector<128x8xf32>
    %56 = arith.select %53, %51, %55 : vector<128x8xi1>, vector<128x8xf32>
    %57 = arith.truncf %56 : vector<128x8xf32> to vector<128x8xbf16>
    %58 = vector.shape_cast %57 : vector<128x8xbf16> to vector<8x16x8xbf16>
    %c0_55 = arith.constant 0 : index
    %c0_56 = arith.constant 0 : index
    %c0_57 = arith.constant 0 : index
    %c0_58 = arith.constant 0 : index
    %c0_59 = arith.constant 0 : index
    %59 = vector.load %arg6[%c0_55, %c0_56, %c0_57, %c0_58, %c0_59] : memref<1x8x2x16x8xbf16, #tpu.memory_space<vmem>>, vector<1x8x1x16x8xbf16>
    %60 = vector.shape_cast %59 : vector<1x8x1x16x8xbf16> to vector<8x16x8xbf16>
    %61 = vector.shape_cast %58 : vector<8x16x8xbf16> to vector<1x8x1x16x8xbf16>
    tpu.vector_store %arg6[%c0_55, %c0_56, %c0_57, %c0_58, %c0_59], %61 {strides = array<i32>} : memref<1x8x2x16x8xbf16, #tpu.memory_space<vmem>>, vector<1x8x1x16x8xbf16>,
    %c0_60 = arith.constant 0 : index
    %c8_61 = arith.constant 8 : index
    %62 = vector.load %arg8[%c0_60, %c8_61] : memref<128x16xf32, #tpu.memory_space<vmem>>, vector<128x8xf32>
    %c0_62 = arith.constant 0 : index
    %c8_63 = arith.constant 8 : index
    %63 = vector.load %arg4[%c0_62, %c8_63] : memref<1x16xf32, #tpu.memory_space<vmem>>, vector<1x8xf32>
    %64 = vector.broadcast %63 : vector<1x8xf32> to vector<128x8xf32>
    %65 = arith.addf %62, %64 : vector<128x8xf32>
    %cst_64 = arith.constant 0.000000e+00 : f32
    %66 = vector.broadcast %cst_64 : f32 to vector<128x8xf32>
    %67 = arith.cmpf oge, %65, %66 : vector<128x8xf32>
    %68 = vector.broadcast %47 : f32 to vector<128x8xf32>
    %69 = arith.mulf %68, %65 : vector<128x8xf32>
    %70 = arith.select %67, %65, %69 : vector<128x8xi1>, vector<128x8xf32>
    %71 = arith.truncf %70 : vector<128x8xf32> to vector<128x8xbf16>
    %72 = vector.shape_cast %71 : vector<128x8xbf16> to vector<8x16x8xbf16>
    %c0_65 = arith.constant 0 : index
    %c0_66 = arith.constant 0 : index
    %c1_67 = arith.constant 1 : index
    %c0_68 = arith.constant 0 : index
    %c0_69 = arith.constant 0 : index
    %73 = vector.load %arg6[%c0_65, %c0_66, %c1_67, %c0_68, %c0_69] : memref<1x8x2x16x8xbf16, #tpu.memory_space<vmem>>, vector<1x8x1x16x8xbf16>
    %74 = vector.shape_cast %73 : vector<1x8x1x16x8xbf16> to vector<8x16x8xbf16>
    %75 = vector.shape_cast %72 : vector<8x16x8xbf16> to vector<1x8x1x16x8xbf16>
    tpu.vector_store %arg6[%c0_65, %c0_66, %c1_67, %c0_68, %c0_69], %75 {strides = array<i32>} : memref<1x8x2x16x8xbf16, #tpu.memory_space<vmem>>, vector<1x8x1x16x8xbf16>,
    return
  }
  func.func @transform_0(%arg0: i32, %arg1: i32) -> (i32, i32, i32, i32) {
    %c0_i32 = arith.constant 0 : i32
    %c0_i32_0 = arith.constant 0 : i32
    %c0_i32_1 = arith.constant 0 : i32
    %c0_i32_2 = arith.constant 0 : i32
    return %arg0, %c0_i32, %c0_i32_0, %c0_i32_1 : i32, i32, i32, i32
  }
  func.func @transform_1(%arg0: i32, %arg1: i32) -> (i32, i32, i32) {
    %c0_i32 = arith.constant 0 : i32
    %c0_i32_0 = arith.constant 0 : i32
    %c0_i32_1 = arith.constant 0 : i32
    %c0_i32_2 = arith.constant 0 : i32
    return %c0_i32, %c0_i32_0, %c0_i32_1 : i32, i32, i32
  }
  func.func @transform_2(%arg0: i32, %arg1: i32) -> (i32, i32) {
    %c0_i32 = arith.constant 0 : i32
    %c0_i32_0 = arith.constant 0 : i32
    %c0_i32_1 = arith.constant 0 : i32
    return %c0_i32, %c0_i32_0 : i32, i32
  }
  func.func @transform_3(%arg0: i32, %arg1: i32) -> i32 {
    %c0_i32 = arith.constant 0 : i32
    %c0_i32_0 = arith.constant 0 : i32
    return %c0_i32 : i32
  }
  func.func @transform_4(%arg0: i32, %arg1: i32) -> (i32, i32, i32, i32, i32) {
    %c0_i32 = arith.constant 0 : i32
    %c0_i32_0 = arith.constant 0 : i32
    %c0_i32_1 = arith.constant 0 : i32
    %c0_i32_2 = arith.constant 0 : i32
    return %arg0, %arg1, %c0_i32, %c0_i32_0, %c0_i32_1 : i32, i32, i32, i32, i32
  }
}

</mosaic_0001>

<llo_original>
// kernel: upsample_block.1
$region0: #{upsample_block.1}
  #allocation0 [shape = 'u32[]', space=smem, size = 0x4, offset = 0x4, fixed_abs, tag = 'smem constant byte address 0x4 - core index']
  #allocation1 [shape = 'u32[144,128]{1,0:T(1,128)}', space=vmem, size = 0x12000, scoped, tag = 'internal scratch']
  #allocation2 [shape = 'bf16[10,16,12]{2,1,0:T(8,128)(2,1)}', space=vmem, size = 0xa000, scoped, tag = 'scratch operand']
  #allocation3 [shape = 'f32[128,16]{1,0:T(8,128)}', space=vmem, size = 0x10000, scoped, tag = 'scratch operand']
  #allocation4 [shape = 'f32[1]{0:T(128)S(6)}', space=smem, size = 0x200, scoped, tag = 'scoped memory for upsample_block.1']
  %s0 = inlined_call_operand.vmem [shape: bf16[2,16,16,4], index: 0, kind: input, shape index: {}]
  %s1 = inlined_call_operand.vmem [shape: bf16[3,12,16], index: 1, kind: input, shape index: {}]
  %s2 = inlined_call_operand.vmem [shape: f32[1,16], index: 2, kind: input, shape index: {}]
  %s3 = inlined_call_operand.<no memory space> [shape: f32[1], index: 3, kind: input, shape index: {}]
  %s4 = inlined_call_operand.vmem [shape: bf16[2,16,2,16,8], index: 4, kind: output, shape index: {}]
  %s5 = sld [smem:[#allocation0]]
  $region65: #{upsample_block.1} parent=0
    _
  %s7 = ssub.s32 1, %s5
  %s8 = scalar_select 0, %s7, %s5
  %9 = sst [smem:[#allocation4]] %s3
  loop: start=0, step=1, limit=6
  $region2: #{upsample_block.1} parent=0 // loop_pre_header
    _
  $region3: #{upsample_block.1} parent=0 // loop_header
    %s11 = sphi 0, %s15
    %p12 = scmp.ge.s32.totalorder %s11, 6
    %s18 = sphi 0, %s30
    %s19 = sphi 0, %s26
    %s20 = sphi 0, %s18
    %s21 = sphi 0, %s19
    %s22 = sphi 0, %s20
    %s23 = sphi 0, %s21
    %s33 = sphi 0, %s35
    %s36 = sphi 0, %s33
    %s37 = sphi 0, %s36
    %s53 = sphi 0, %s37
    %s57 = sphi 0, %s57
    %s59 = sphi 0, %s57
    %s60 = sphi 0, %s59
    %s74 = sphi 0, %s60
    %s78 = sphi 0, %s78
    %s80 = sphi 0, %s78
    %s81 = sphi 0, %s80
    %s95 = sphi 0, %s81
    %s99 = sphi 0, %s99
    %s101 = sphi 0, %s99
    %s102 = sphi 0, %s101
    %s116 = sphi 0, %s102
    %s124 = sphi 0, %s126
    %s127 = sphi 0, %s124
    %s128 = sphi 0, %s127
    %s144 = sphi 0, %s128
  $region4: #{upsample_block.1} parent=0 // loop_header_branch
    %14 = sbr.rel (%p12) target = $region8
  $region5: #{upsample_block.1} parent=0 // loop_body
    %s16 = ssub.s32 %s11, 1
    %s17 = ssub.s32 %s11, 2
    %s24 = sadd.s32 1, %s19
    %p25 = scmp.ge.s32.totalorder %s24, 2
    %s26 = scalar_select %p25, 0, %s24
    %s27 = sadd.s32 1, %s18
    %s28 = scalar_select %p25, %s27, %s18
    %p29 = scmp.ge.s32.totalorder %s28, 2
    %s30 = scalar_select %p29, 0, %s28
    %s31 = ssub.s32 %s18, %s30
    %p32 = scmp.eq.s32.totalorder %s31, 0
    %s34 = sadd.s32 %s33, 1
    %s35 = scalar_select %p32, %s33, %s34
    %p38 = pneg %p32
    %p39 = scmp.eq.s32.totalorder %s11, 3
    %p40 = por %p38, %p39
    %p41 = scmp.ne.s32.totalorder %s33, %s36
    %p42 = scmp.eq.s32.totalorder %s11, 0
    %p43 = por %p41, %p42
    %p44 = scmp.ne.s32.totalorder %s33, %s36
    %p45 = scmp.eq.s32.totalorder %s16, 3
    %p46 = por %p44, %p45
    %p47 = scmp.ne.s32.totalorder %s36, %s37
    %p48 = scmp.eq.s32.totalorder %s16, 0
    %p49 = por %p47, %p48
    %p50 = scmp.ne.s32.totalorder %s36, %s37
    %p51 = scmp.eq.s32.totalorder %s17, 3
    %p52 = por %p50, %p51
    %p54 = scmp.ne.s32.totalorder %s37, %s53
    %p55 = scmp.eq.s32.totalorder %s17, 0
    %p56 = por %p54, %p55
    %s58 = sadd.s32 %s57, 1
    %p61 = scmp.eq.s32.totalorder %s11, 3
    %p62 = scmp.ne.s32.totalorder %s57, %s59
    %p63 = scmp.eq.s32.totalorder %s11, 0
    %p64 = por %p62, %p63
    %p65 = scmp.ne.s32.totalorder %s57, %s59
    %p66 = scmp.eq.s32.totalorder %s16, 3
    %p67 = por %p65, %p66
    %p68 = scmp.ne.s32.totalorder %s59, %s60
    %p69 = scmp.eq.s32.totalorder %s16, 0
    %p70 = por %p68, %p69
    %p71 = scmp.ne.s32.totalorder %s59, %s60
    %p72 = scmp.eq.s32.totalorder %s17, 3
    %p73 = por %p71, %p72
    %p75 = scmp.ne.s32.totalorder %s60, %s74
    %p76 = scmp.eq.s32.totalorder %s17, 0
    %p77 = por %p75, %p76
    %s79 = sadd.s32 %s78, 1
    %p82 = scmp.eq.s32.totalorder %s11, 3
    %p83 = scmp.ne.s32.totalorder %s78, %s80
    %p84 = scmp.eq.s32.totalorder %s11, 0
    %p85 = por %p83, %p84
    %p86 = scmp.ne.s32.totalorder %s78, %s80
    %p87 = scmp.eq.s32.totalorder %s16, 3
    %p88 = por %p86, %p87
    %p89 = scmp.ne.s32.totalorder %s80, %s81
    %p90 = scmp.eq.s32.totalorder %s16, 0
    %p91 = por %p89, %p90
    %p92 = scmp.ne.s32.totalorder %s80, %s81
    %p93 = scmp.eq.s32.totalorder %s17, 3
    %p94 = por %p92, %p93
    %p96 = scmp.ne.s32.totalorder %s81, %s95
    %p97 = scmp.eq.s32.totalorder %s17, 0
    %p98 = por %p96, %p97
    %s100 = sadd.s32 %s99, 1
    %p103 = scmp.eq.s32.totalorder %s11, 3
    %p104 = scmp.ne.s32.totalorder %s99, %s101
    %p105 = scmp.eq.s32.totalorder %s11, 0
    %p106 = por %p104, %p105
    %p107 = scmp.ne.s32.totalorder %s99, %s101
    %p108 = scmp.eq.s32.totalorder %s16, 3
    %p109 = por %p107, %p108
    %p110 = scmp.ne.s32.totalorder %s101, %s102
    %p111 = scmp.eq.s32.totalorder %s16, 0
    %p112 = por %p110, %p111
    %p113 = scmp.ne.s32.totalorder %s101, %s102
    %p114 = scmp.eq.s32.totalorder %s17, 3
    %p115 = por %p113, %p114
    %p117 = scmp.ne.s32.totalorder %s102, %s116
    %p118 = scmp.eq.s32.totalorder %s17, 0
    %p119 = por %p117, %p118
    %s120 = ssub.s32 %s18, %s30
    %s121 = ssub.s32 %s19, %s26
    %s122 = sor.u32 %s120, %s121
    %p123 = scmp.eq.s32.totalorder %s122, 0
    %s125 = sadd.s32 %s124, 1
    %s126 = scalar_select %p123, %s124, %s125
    %p129 = pneg %p123
    %p130 = scmp.eq.s32.totalorder %s11, 3
    %p131 = por %p129, %p130
    %p132 = scmp.ne.s32.totalorder %s124, %s127
    %p133 = scmp.eq.s32.totalorder %s11, 0
    %p134 = por %p132, %p133
    %p135 = scmp.ne.s32.totalorder %s124, %s127
    %p136 = scmp.eq.s32.totalorder %s16, 3
    %p137 = por %p135, %p136
    %p138 = scmp.ne.s32.totalorder %s127, %s128
    %p139 = scmp.eq.s32.totalorder %s16, 0
    %p140 = por %p138, %p139
    %p141 = scmp.ne.s32.totalorder %s127, %s128
    %p142 = scmp.eq.s32.totalorder %s17, 3
    %p143 = por %p141, %p142
    %p145 = scmp.ne.s32.totalorder %s128, %s144
    %p146 = scmp.eq.s32.totalorder %s17, 0
    %p147 = por %p145, %p146
    %p148 = scmp.le.s32.totalorder 1, %s11
    %p149 = scmp.lt.s32.totalorder %s11, 5
    %p150 = pnand %p148, %p149
    %p151 = pneg %p150
    // Predicated region
    $region9: #{upsample_block.1} parent=5 // pred_check
      _
    $region10: #{upsample_block.1} parent=5 // pred_check_branch
      %153 = sbr.rel (%p150) target = $region12
    $region11: #{upsample_block.1} parent=5 // pred_region
      %s154 = ssub.s32 %s11, 1
      // Predicated region
      $region13: #{upsample_block.1} parent=11 // pred_check
        %p155 = pneg %p70
      $region14: #{upsample_block.1} parent=11 // pred_check_branch
        %157 = sbr.rel (%p155) target = $region16
      $region15: #{upsample_block.1} parent=11 // pred_region
        _
      $region16: #{upsample_block.1} parent=11 // pred_fallthru
        _
      // Predicated region
      $region17: #{upsample_block.1} parent=11 // pred_check
        %p158 = pneg %p91
      $region18: #{upsample_block.1} parent=11 // pred_check_branch
        %160 = sbr.rel (%p158) target = $region20
      $region19: #{upsample_block.1} parent=11 // pred_region
        _
      $region20: #{upsample_block.1} parent=11 // pred_fallthru
        _
      // Predicated region
      $region21: #{upsample_block.1} parent=11 // pred_check
        %p161 = pneg %p112
      $region22: #{upsample_block.1} parent=11 // pred_check_branch
        %163 = sbr.rel (%p161) target = $region24
      $region23: #{upsample_block.1} parent=11 // pred_region
        _
      $region24: #{upsample_block.1} parent=11 // pred_fallthru
        _
    $region12: #{upsample_block.1} parent=5 // pred_fallthru
      _
    %p164 = scmp.lt.s32.totalorder %s11, 4
    // Predicated region
    $region25: #{upsample_block.1} parent=5 // pred_check
      %p165 = pneg %p164
    $region26: #{upsample_block.1} parent=5 // pred_check_branch
      %167 = sbr.rel (%p165) target = $region28
    $region27: #{upsample_block.1} parent=5 // pred_region
      // Predicated region
      $region29: #{upsample_block.1} parent=27 // pred_check
        %p168 = pneg %p43
      $region30: #{upsample_block.1} parent=27 // pred_check_branch
        %170 = sbr.rel (%p168) target = $region32
      $region31: #{upsample_block.1} parent=27 // pred_region
        %p171 = scmp.lt.s32.totalorder %s18, 1
        %s172 = scalar_select %p171, %s18, 1
        %s173 = smul.addr %s172, 32
        %s174 = smul.addr %s173, 4
        %s175 = scalar_lea.vmem %s0, %s174
      $region32: #{upsample_block.1} parent=27 // pred_fallthru
        _
    $region28: #{upsample_block.1} parent=5 // pred_fallthru
      _
    %p176 = scmp.le.s32.totalorder 1, %s11
    %p177 = scmp.lt.s32.totalorder %s11, 5
    %p178 = pnand %p176, %p177
    %p179 = pneg %p178
    // Predicated region
    $region33: #{upsample_block.1} parent=5 // pred_check
      _
    $region34: #{upsample_block.1} parent=5 // pred_check_branch
      %181 = sbr.rel (%p178) target = $region36
    $region35: #{upsample_block.1} parent=5 // pred_region
      %s182 = ssub.s32 %s11, 1
      %p183 = scmp.lt.s32.totalorder %s20, 1
      %s184 = scalar_select %p183, %s20, 1
      %s185 = smul.addr %s184, 32
      %s186 = smul.addr %s185, 4
      %s187 = scalar_lea.vmem %s0, %s186
      %p188 = pneg %p49
      %p189 = pneg %p46
      %p190 = pneg %p70
      %p191 = pneg %p67
      %p192 = pneg %p91
      %p193 = pneg %p88
      %p194 = pneg %p112
      %p195 = pneg %p109
      %p196 = pneg %p140
      %p197 = pneg %p137
      %s198 = smul.u32 8, %s21
      %p199 = scmp.lt.s32.totalorder %s20, 1
      %s200 = scalar_select %p199, %s20, 1
      %p201 = scmp.lt.s32.totalorder %s198, 15
      %s202 = scalar_select %p201, %s198, 15
      %s203 = smul.addr %s202, 4
      %s204 = smul.addr %s200, 64
      %s205 = sadd.s32 %s203, %s204
      %s206 = smul.addr %s205, 4
      %s207 = scalar_lea.vmem %s4, %s206
      %p208 = scmp.lt.s32.totalorder %s20, 1
      %s209 = scalar_select %p208, %s20, 1
      %s210 = smul.addr %s209, 32
      %s211 = smul.addr %s210, 4
      %s212 = scalar_lea.vmem %s0, %s211
      %s213 = smul.u32 8, %s21
      %p214 = scmp.lt.s32.totalorder %s20, 1
      %s215 = scalar_select %p214, %s20, 1
      %p216 = scmp.lt.s32.totalorder %s213, 15
      %s217 = scalar_select %p216, %s213, 15
      %s218 = smul.addr %s217, 4
      %s219 = smul.addr %s215, 64
      %s220 = sadd.s32 %s218, %s219
      %s221 = smul.addr %s220, 4
      %s222 = scalar_lea.vmem %s4, %s221
      %s223 = smul.u32 8, %s21
      %s225 = smul.u32 %s21, 8
      %s226 = smul.u32 %s225, 2
      %s227 = smul.addr %s226, 4
      %s228 = scalar_lea.vmem %s212, %s227
      %v229 = vld [vmem:[%s228] sm:$0xf]
      %v230 = vld [vmem:[%s228 + $0x4] sm:$0xf]
      %v231 = vld [vmem:[%s228 + $0x8] sm:$0xf]
      %v232 = vld [vmem:[%s228 + $0xc] sm:$0xf]
      %v233 = vld [vmem:[%s228 + $0x10] sm:$0xf]
      %v234 = vld [vmem:[%s228 + $0x14] sm:$0xf]
      %v235 = vld [vmem:[%s228 + $0x18] sm:$0xf]
      %v236 = vld [vmem:[%s228 + $0x1c] sm:$0xf]
      %v237 = vld [vmem:[%s228 + $0x20] sm:$0xf]
      %v238 = vld [vmem:[%s228 + $0x24] sm:$0xf]
      %v239 = vld [vmem:[%s228 + $0x28] sm:$0xf]
      %v240 = vld [vmem:[%s228 + $0x2c] sm:$0xf]
      %v241 = vld [vmem:[%s228 + $0x30] sm:$0xf]
      %v242 = vld [vmem:[%s228 + $0x34] sm:$0xf]
      %v243 = vld [vmem:[%s228 + $0x38] sm:$0xf]
      %v244 = vld [vmem:[%s228 + $0x3c] sm:$0xf]
      %261 = vrot.lane.b32.xlu0 %v229, 4
      %v262 = vpop.permute.xlu0 %261
      %263 = vrot.lane.b32.xlu0 %v230, 4
      %v264 = vpop.permute.xlu0 %263
      %265 = vrot.lane.b32.xlu0 %v231, 4
      %v266 = vpop.permute.xlu0 %265
      %267 = vrot.lane.b32.xlu0 %v232, 4
      %v268 = vpop.permute.xlu0 %267
      %269 = vrot.lane.b32.xlu0 %v233, 4
      %v270 = vpop.permute.xlu0 %269
      %271 = vrot.lane.b32.xlu0 %v234, 4
      %v272 = vpop.permute.xlu0 %271
      %273 = vrot.lane.b32.xlu0 %v235, 4
      %v274 = vpop.permute.xlu0 %273
      %275 = vrot.lane.b32.xlu0 %v236, 4
      %v276 = vpop.permute.xlu0 %275
      %277 = vrot.lane.b32.xlu0 %v237, 4
      %v278 = vpop.permute.xlu0 %277
      %279 = vrot.lane.b32.xlu0 %v238, 4
      %v280 = vpop.permute.xlu0 %279
      %281 = vrot.lane.b32.xlu0 %v239, 4
      %v282 = vpop.permute.xlu0 %281
      %283 = vrot.lane.b32.xlu0 %v240, 4
      %v284 = vpop.permute.xlu0 %283
      %285 = vrot.lane.b32.xlu0 %v241, 4
      %v286 = vpop.permute.xlu0 %285
      %287 = vrot.lane.b32.xlu0 %v242, 4
      %v288 = vpop.permute.xlu0 %287
      %289 = vrot.lane.b32.xlu0 %v243, 4
      %v290 = vpop.permute.xlu0 %289
      %291 = vrot.lane.b32.xlu0 %v244, 4
      %v292 = vpop.permute.xlu0 %291
      %s309 = scalar_lea.vmem [#allocation2], 8
      %vm310 = vcmask 60448
      %311 = vst.msk [vmem:[%s309] sm:$0xf] %vm310, %v262
      %312 = vst.msk [vmem:[%s309 + $0x4] sm:$0xf] %vm310, %v264
      %313 = vst.msk [vmem:[%s309 + $0x8] sm:$0xf] %vm310, %v266
      %314 = vst.msk [vmem:[%s309 + $0xc] sm:$0xf] %vm310, %v268
      %315 = vst.msk [vmem:[%s309 + $0x10] sm:$0xf] %vm310, %v270
      %316 = vst.msk [vmem:[%s309 + $0x14] sm:$0xf] %vm310, %v272
      %317 = vst.msk [vmem:[%s309 + $0x18] sm:$0xf] %vm310, %v274
      %318 = vst.msk [vmem:[%s309 + $0x1c] sm:$0xf] %vm310, %v276
      %319 = vst.msk [vmem:[%s309 + $0x20] sm:$0xf] %vm310, %v278
      %320 = vst.msk [vmem:[%s309 + $0x24] sm:$0xf] %vm310, %v280
      %321 = vst.msk [vmem:[%s309 + $0x28] sm:$0xf] %vm310, %v282
      %322 = vst.msk [vmem:[%s309 + $0x2c] sm:$0xf] %vm310, %v284
      %323 = vst.msk [vmem:[%s309 + $0x30] sm:$0xf] %vm310, %v286
      %324 = vst.msk [vmem:[%s309 + $0x34] sm:$0xf] %vm310, %v288
      %325 = vst.msk [vmem:[%s309 + $0x38] sm:$0xf] %vm310, %v290
      %326 = vst.msk [vmem:[%s309 + $0x3c] sm:$0xf] %vm310, %v292
      %vm327 = vsmask.f32 256
      %vm328 = vsmask.f32 4368
      %vm329 = vmor %vm327, %vm328
      %v331 = vshrl.u32 %v229, 16
      %v333 = vrot.slane %v331, 7
      %v334 = vshll.u32 %v229, 16
      %v336 = vor.u32 %v333, %v334
      %v337 = vrot.slane %v333, 4
      %v339 = vshrl.u32 %v230, 16
      %v341 = vrot.slane %v339, 7
      %v342 = vshll.u32 %v230, 16
      %v344 = vor.u32 %v341, %v342
      %v345 = vsel %vm329, %v337, %v344
      %v347 = vshrl.u32 %v231, 16
      %v349 = vrot.slane %v347, 7
      %v350 = vshll.u32 %v231, 16
      %v352 = vor.u32 %v349, %v350
      %v353 = vrot.slane %v349, 4
      %v355 = vshrl.u32 %v232, 16
      %v357 = vrot.slane %v355, 7
      %v358 = vshll.u32 %v232, 16
      %v360 = vor.u32 %v357, %v358
      %v361 = vsel %vm329, %v353, %v360
      %v363 = vshrl.u32 %v233, 16
      %v365 = vrot.slane %v363, 7
      %v366 = vshll.u32 %v233, 16
      %v368 = vor.u32 %v365, %v366
      %v369 = vrot.slane %v365, 4
      %v371 = vshrl.u32 %v234, 16
      %v373 = vrot.slane %v371, 7
      %v374 = vshll.u32 %v234, 16
      %v376 = vor.u32 %v373, %v374
      %v377 = vsel %vm329, %v369, %v376
      %v379 = vshrl.u32 %v235, 16
      %v381 = vrot.slane %v379, 7
      %v382 = vshll.u32 %v235, 16
      %v384 = vor.u32 %v381, %v382
      %v385 = vrot.slane %v381, 4
      %v387 = vshrl.u32 %v236, 16
      %v389 = vrot.slane %v387, 7
      %v390 = vshll.u32 %v236, 16
      %v392 = vor.u32 %v389, %v390
      %v393 = vsel %vm329, %v385, %v392
      %v395 = vshrl.u32 %v237, 16
      %v397 = vrot.slane %v395, 7
      %v398 = vshll.u32 %v237, 16
      %v400 = vor.u32 %v397, %v398
      %v401 = vrot.slane %v397, 4
      %v403 = vshrl.u32 %v238, 16
      %v405 = vrot.slane %v403, 7
      %v406 = vshll.u32 %v238, 16
      %v408 = vor.u32 %v405, %v406
      %v409 = vsel %vm329, %v401, %v408
      %v411 = vshrl.u32 %v239, 16
      %v413 = vrot.slane %v411, 7
      %v414 = vshll.u32 %v239, 16
      %v416 = vor.u32 %v413, %v414
      %v417 = vrot.slane %v413, 4
      %v419 = vshrl.u32 %v240, 16
      %v421 = vrot.slane %v419, 7
      %v422 = vshll.u32 %v240, 16
      %v424 = vor.u32 %v421, %v422
      %v425 = vsel %vm329, %v417, %v424
      %v427 = vshrl.u32 %v241, 16
      %v429 = vrot.slane %v427, 7
      %v430 = vshll.u32 %v241, 16
      %v432 = vor.u32 %v429, %v430
      %v433 = vrot.slane %v429, 4
      %v435 = vshrl.u32 %v242, 16
      %v437 = vrot.slane %v435, 7
      %v438 = vshll.u32 %v242, 16
      %v440 = vor.u32 %v437, %v438
      %v441 = vsel %vm329, %v433, %v440
      %v443 = vshrl.u32 %v243, 16
      %v445 = vrot.slane %v443, 7
      %v446 = vshll.u32 %v243, 16
      %v448 = vor.u32 %v445, %v446
      %v449 = vrot.slane %v445, 4
      %v451 = vshrl.u32 %v244, 16
      %v453 = vrot.slane %v451, 7
      %v454 = vshll.u32 %v244, 16
      %v456 = vor.u32 %v453, %v454
      %v457 = vsel %vm329, %v449, %v456
      %vm474 = vcmask 27648
      %vm475 = vsmask.f32 7938
      %vm476 = vmand %vm474, %vm475
      %v477 = vld [vmem:[%s309] sm:$0xf]
      %v478 = vsel %vm476, %v336, %v477
      %479 = vst [vmem:[%s309] sm:$0xf] %v478
      %vm480 = vcmask 27648
      %481 = vst.msk [vmem:[%s309 + $0x4] sm:$0xf] %vm480, %v345
      %v482 = vld [vmem:[%s309 + $0x8] sm:$0xf]
      %v483 = vsel %vm476, %v352, %v482
      %484 = vst [vmem:[%s309 + $0x8] sm:$0xf] %v483
      %485 = vst.msk [vmem:[%s309 + $0xc] sm:$0xf] %vm480, %v361
      %v486 = vld [vmem:[%s309 + $0x10] sm:$0xf]
      %v487 = vsel %vm476, %v368, %v486
      %488 = vst [vmem:[%s309 + $0x10] sm:$0xf] %v487
      %489 = vst.msk [vmem:[%s309 + $0x14] sm:$0xf] %vm480, %v377
      %v490 = vld [vmem:[%s309 + $0x18] sm:$0xf]
      %v491 = vsel %vm476, %v384, %v490
      %492 = vst [vmem:[%s309 + $0x18] sm:$0xf] %v491
      %493 = vst.msk [vmem:[%s309 + $0x1c] sm:$0xf] %vm480, %v393
      %v494 = vld [vmem:[%s309 + $0x20] sm:$0xf]
      %v495 = vsel %vm476, %v400, %v494
      %496 = vst [vmem:[%s309 + $0x20] sm:$0xf] %v495
      %497 = vst.msk [vmem:[%s309 + $0x24] sm:$0xf] %vm480, %v409
      %v498 = vld [vmem:[%s309 + $0x28] sm:$0xf]
      %v499 = vsel %vm476, %v416, %v498
      %500 = vst [vmem:[%s309 + $0x28] sm:$0xf] %v499
      %501 = vst.msk [vmem:[%s309 + $0x2c] sm:$0xf] %vm480, %v425
      %v502 = vld [vmem:[%s309 + $0x30] sm:$0xf]
      %v503 = vsel %vm476, %v432, %v502
      %504 = vst [vmem:[%s309 + $0x30] sm:$0xf] %v503
      %505 = vst.msk [vmem:[%s309 + $0x34] sm:$0xf] %vm480, %v441
      %v506 = vld [vmem:[%s309 + $0x38] sm:$0xf]
      %v507 = vsel %vm476, %v448, %v506
      %508 = vst [vmem:[%s309 + $0x38] sm:$0xf] %v507
      %509 = vst.msk [vmem:[%s309 + $0x3c] sm:$0xf] %vm480, %v457
      %vm510 = vsmask.f32 3328
      %vm511 = vsmask.f32 7440
      %vm512 = vmor %vm510, %vm511
      %v513 = vrot.slane %v331, 4
      %v514 = vrot.slane %v334, 5
      %v515 = vor.u32 %v513, %v514
      %v516 = vrot.slane %v515, 4
      %v517 = vrot.slane %v342, 5
      %v518 = vsel %vm512, %v516, %v517
      %v519 = vrot.slane %v339, 4
      %v520 = vor.u32 %v519, %v517
      %v521 = vrot.slane %v520, 4
      %v522 = vrot.slane %v347, 4
      %v523 = vrot.slane %v350, 5
      %v524 = vor.u32 %v522, %v523
      %v525 = vrot.slane %v524, 4
      %v526 = vrot.slane %v358, 5
      %v527 = vsel %vm512, %v525, %v526
      %v528 = vrot.slane %v355, 4
      %v529 = vor.u32 %v528, %v526
      %v530 = vrot.slane %v529, 4
      %v531 = vrot.slane %v363, 4
      %v532 = vrot.slane %v366, 5
      %v533 = vor.u32 %v531, %v532
      %v534 = vrot.slane %v533, 4
      %v535 = vrot.slane %v374, 5
      %v536 = vsel %vm512, %v534, %v535
      %v537 = vrot.slane %v371, 4
      %v538 = vor.u32 %v537, %v535
      %v539 = vrot.slane %v538, 4
      %v540 = vrot.slane %v379, 4
      %v541 = vrot.slane %v382, 5
      %v542 = vor.u32 %v540, %v541
      %v543 = vrot.slane %v542, 4
      %v544 = vrot.slane %v390, 5
      %v545 = vsel %vm512, %v543, %v544
      %v546 = vrot.slane %v387, 4
      %v547 = vor.u32 %v546, %v544
      %v548 = vrot.slane %v547, 4
      %v549 = vrot.slane %v395, 4
      %v550 = vrot.slane %v398, 5
      %v551 = vor.u32 %v549, %v550
      %v552 = vrot.slane %v551, 4
      %v553 = vrot.slane %v406, 5
      %v554 = vsel %vm512, %v552, %v553
      %v555 = vrot.slane %v403, 4
      %v556 = vor.u32 %v555, %v553
      %v557 = vrot.slane %v556, 4
      %v558 = vrot.slane %v411, 4
      %v559 = vrot.slane %v414, 5
      %v560 = vor.u32 %v558, %v559
      %v561 = vrot.slane %v560, 4
      %v562 = vrot.slane %v422, 5
      %v563 = vsel %vm512, %v561, %v562
      %v564 = vrot.slane %v419, 4
      %v565 = vor.u32 %v564, %v562
      %v566 = vrot.slane %v565, 4
      %v567 = vrot.slane %v427, 4
      %v568 = vrot.slane %v430, 5
      %v569 = vor.u32 %v567, %v568
      %v570 = vrot.slane %v569, 4
      %v571 = vrot.slane %v438, 5
      %v572 = vsel %vm512, %v570, %v571
      %v573 = vrot.slane %v435, 4
      %v574 = vor.u32 %v573, %v571
      %v575 = vrot.slane %v574, 4
      %v576 = vrot.slane %v443, 4
      %v577 = vrot.slane %v446, 5
      %v578 = vor.u32 %v576, %v577
      %v579 = vrot.slane %v578, 4
      %v580 = vrot.slane %v454, 5
      %v581 = vsel %vm512, %v579, %v580
      %v582 = vrot.slane %v451, 4
      %v583 = vor.u32 %v582, %v580
      %v584 = vrot.slane %v583, 4
      %585 = vrot.lane.b32.xlu0 %v518, 8
      %v586 = vpop.permute.xlu0 %585
      %587 = vrot.lane.b32.xlu0 %v521, 8
      %v588 = vpop.permute.xlu0 %587
      %589 = vrot.lane.b32.xlu0 %v527, 8
      %v590 = vpop.permute.xlu0 %589
      %591 = vrot.lane.b32.xlu0 %v530, 8
      %v592 = vpop.permute.xlu0 %591
      %593 = vrot.lane.b32.xlu0 %v536, 8
      %v594 = vpop.permute.xlu0 %593
      %595 = vrot.lane.b32.xlu0 %v539, 8
      %v596 = vpop.permute.xlu0 %595
      %597 = vrot.lane.b32.xlu0 %v545, 8
      %v598 = vpop.permute.xlu0 %597
      %599 = vrot.lane.b32.xlu0 %v548, 8
      %v600 = vpop.permute.xlu0 %599
      %601 = vrot.lane.b32.xlu0 %v554, 8
      %v602 = vpop.permute.xlu0 %601
      %603 = vrot.lane.b32.xlu0 %v557, 8
      %v604 = vpop.permute.xlu0 %603
      %605 = vrot.lane.b32.xlu0 %v563, 8
      %v606 = vpop.permute.xlu0 %605
      %607 = vrot.lane.b32.xlu0 %v566, 8
      %v608 = vpop.permute.xlu0 %607
      %609 = vrot.lane.b32.xlu0 %v572, 8
      %v610 = vpop.permute.xlu0 %609
      %611 = vrot.lane.b32.xlu0 %v575, 8
      %v612 = vpop.permute.xlu0 %611
      %613 = vrot.lane.b32.xlu0 %v581, 8
      %v614 = vpop.permute.xlu0 %613
      %615 = vrot.lane.b32.xlu0 %v584, 8
      %v616 = vpop.permute.xlu0 %615
      %vm633 = vcmask 93248
      %634 = vst.msk [vmem:[%s309] sm:$0xf] %vm633, %v586
      %vm635 = vcmask 93248
      %vm636 = vmand %vm635, %vm510
      %v637 = vld [vmem:[%s309 + $0x4] sm:$0xf]
      %v638 = vsel %vm636, %v588, %v637
      %639 = vst [vmem:[%s309 + $0x4] sm:$0xf] %v638
      %640 = vst.msk [vmem:[%s309 + $0x8] sm:$0xf] %vm633, %v590
      %v641 = vld [vmem:[%s309 + $0xc] sm:$0xf]
      %v642 = vsel %vm636, %v592, %v641
      %643 = vst [vmem:[%s309 + $0xc] sm:$0xf] %v642
      %644 = vst.msk [vmem:[%s309 + $0x10] sm:$0xf] %vm633, %v594
      %v645 = vld [vmem:[%s309 + $0x14] sm:$0xf]
      %v646 = vsel %vm636, %v596, %v645
      %647 = vst [vmem:[%s309 + $0x14] sm:$0xf] %v646
      %648 = vst.msk [vmem:[%s309 + $0x18] sm:$0xf] %vm633, %v598
      %v649 = vld [vmem:[%s309 + $0x1c] sm:$0xf]
      %v650 = vsel %vm636, %v600, %v649
      %651 = vst [vmem:[%s309 + $0x1c] sm:$0xf] %v650
      %652 = vst.msk [vmem:[%s309 + $0x20] sm:$0xf] %vm633, %v602
      %v653 = vld [vmem:[%s309 + $0x24] sm:$0xf]
      %v654 = vsel %vm636, %v604, %v653
      %655 = vst [vmem:[%s309 + $0x24] sm:$0xf] %v654
      %656 = vst.msk [vmem:[%s309 + $0x28] sm:$0xf] %vm633, %v606
      %v657 = vld [vmem:[%s309 + $0x2c] sm:$0xf]
      %v658 = vsel %vm636, %v608, %v657
      %659 = vst [vmem:[%s309 + $0x2c] sm:$0xf] %v658
      %660 = vst.msk [vmem:[%s309 + $0x30] sm:$0xf] %vm633, %v610
      %v661 = vld [vmem:[%s309 + $0x34] sm:$0xf]
      %v662 = vsel %vm636, %v612, %v661
      %663 = vst [vmem:[%s309 + $0x34] sm:$0xf] %v662
      %664 = vst.msk [vmem:[%s309 + $0x38] sm:$0xf] %vm633, %v614
      %v665 = vld [vmem:[%s309 + $0x3c] sm:$0xf]
      %v666 = vsel %vm636, %v616, %v665
      %667 = vst [vmem:[%s309 + $0x3c] sm:$0xf] %v666
      %p668 = scmp.gt.s32.totalorder %s21, 0
      // Predicated region
      $region37: #{upsample_block.1} parent=35 // pred_check
        %p669 = pneg %p668
      $region38: #{upsample_block.1} parent=35 // pred_check_branch
        %671 = sbr.rel (%p669) target = $region40
      $region39: #{upsample_block.1} parent=35 // pred_region
        %s672 = ssub.s32 %s225, 1
        %s673 = smul.u32 %s672, 2
        %s674 = smul.addr %s673, 4
        %s675 = scalar_lea.vmem %s212, %s674
        %v676 = vld [vmem:[%s675] sm:$0xf]
        %v677 = vld [vmem:[%s675 + $0x4] sm:$0xf]
        %680 = vrot.lane.b32.xlu0 %v676, 4
        %v681 = vpop.permute.xlu0 %680
        %682 = vrot.lane.b32.xlu0 %v677, 4
        %v683 = vpop.permute.xlu0 %682
        %686 = vst.msk [vmem:[#allocation2] sm:$0xf] %vm310, %v681
        %687 = vst.msk [vmem:[#allocation2 + $0x4] sm:$0xf] %vm310, %v683
        %v689 = vshrl.u32 %v676, 16
        %v691 = vrot.slane %v689, 7
        %v692 = vshll.u32 %v676, 16
        %v694 = vor.u32 %v691, %v692
        %v695 = vrot.slane %v691, 4
        %v697 = vshrl.u32 %v677, 16
        %v699 = vrot.slane %v697, 7
        %v700 = vshll.u32 %v677, 16
        %v702 = vor.u32 %v699, %v700
        %v703 = vsel %vm329, %v695, %v702
        %v706 = vld [vmem:[#allocation2] sm:$0xf]
        %v707 = vsel %vm476, %v694, %v706
        %708 = vst [vmem:[#allocation2] sm:$0xf] %v707
        %709 = vst.msk [vmem:[#allocation2 + $0x4] sm:$0xf] %vm480, %v703
        %v710 = vrot.slane %v689, 4
        %v711 = vrot.slane %v692, 5
        %v712 = vor.u32 %v710, %v711
        %v713 = vrot.slane %v712, 4
        %v714 = vrot.slane %v700, 5
        %v715 = vsel %vm512, %v713, %v714
        %v716 = vrot.slane %v697, 4
        %v717 = vor.u32 %v716, %v714
        %v718 = vrot.slane %v717, 4
        %719 = vrot.lane.b32.xlu0 %v715, 8
        %v720 = vpop.permute.xlu0 %719
        %721 = vrot.lane.b32.xlu0 %v718, 8
        %v722 = vpop.permute.xlu0 %721
        %725 = vst.msk [vmem:[#allocation2] sm:$0xf] %vm633, %v720
        %v726 = vld [vmem:[#allocation2 + $0x4] sm:$0xf]
        %v727 = vsel %vm636, %v722, %v726
        %728 = vst [vmem:[#allocation2 + $0x4] sm:$0xf] %v727
      $region40: #{upsample_block.1} parent=35 // pred_fallthru
        _
      %p729 = scmp.eq.s32.totalorder %s21, 0
      // Predicated region
      $region41: #{upsample_block.1} parent=35 // pred_check
        %p730 = pneg %p729
      $region42: #{upsample_block.1} parent=35 // pred_check_branch
        %732 = sbr.rel (%p730) target = $region44
      $region43: #{upsample_block.1} parent=35 // pred_region
        %vm733 = vcmask 93184
        %734 = vst.msk [vmem:[#allocation2] sm:$0xf] %vm733, 0
        %735 = vst.msk [vmem:[#allocation2 + $0x4] sm:$0xf] %vm733, 0
      $region44: #{upsample_block.1} parent=35 // pred_fallthru
        _
      %p736 = scmp.lt.s32.totalorder %s21, 1
      // Predicated region
      $region45: #{upsample_block.1} parent=35 // pred_check
        %p737 = pneg %p736
      $region46: #{upsample_block.1} parent=35 // pred_check_branch
        %739 = sbr.rel (%p737) target = $region48
      $region47: #{upsample_block.1} parent=35 // pred_region
        %s740 = sadd.s32 %s21, 1
        %s741 = smul.u32 %s740, 8
        %s742 = smul.u32 %s741, 2
        %s743 = smul.addr %s742, 4
        %s744 = scalar_lea.vmem %s212, %s743
        %v745 = vld [vmem:[%s744] sm:$0xf]
        %v746 = vld [vmem:[%s744 + $0x4] sm:$0xf]
        %749 = vrot.lane.b32.xlu0 %v745, 4
        %v750 = vpop.permute.xlu0 %749
        %751 = vrot.lane.b32.xlu0 %v746, 4
        %v752 = vpop.permute.xlu0 %751
        %s755 = scalar_lea.vmem [#allocation2], 72
        %756 = vst.msk [vmem:[%s755] sm:$0xf] %vm310, %v750
        %757 = vst.msk [vmem:[%s755 + $0x4] sm:$0xf] %vm310, %v752
        %v759 = vshrl.u32 %v745, 16
        %v761 = vrot.slane %v759, 7
        %v762 = vshll.u32 %v745, 16
        %v764 = vor.u32 %v761, %v762
        %v765 = vrot.slane %v761, 4
        %v767 = vshrl.u32 %v746, 16
        %v769 = vrot.slane %v767, 7
        %v770 = vshll.u32 %v746, 16
        %v772 = vor.u32 %v769, %v770
        %v773 = vsel %vm329, %v765, %v772
        %v776 = vld [vmem:[%s755] sm:$0xf]
        %v777 = vsel %vm476, %v764, %v776
        %778 = vst [vmem:[%s755] sm:$0xf] %v777
        %779 = vst.msk [vmem:[%s755 + $0x4] sm:$0xf] %vm480, %v773
        %v780 = vrot.slane %v759, 4
        %v781 = vrot.slane %v762, 5
        %v782 = vor.u32 %v780, %v781
        %v783 = vrot.slane %v782, 4
        %v784 = vrot.slane %v770, 5
        %v785 = vsel %vm512, %v783, %v784
        %v786 = vrot.slane %v767, 4
        %v787 = vor.u32 %v786, %v784
        %v788 = vrot.slane %v787, 4
        %789 = vrot.lane.b32.xlu0 %v785, 8
        %v790 = vpop.permute.xlu0 %789
        %791 = vrot.lane.b32.xlu0 %v788, 8
        %v792 = vpop.permute.xlu0 %791
        %795 = vst.msk [vmem:[%s755] sm:$0xf] %vm633, %v790
        %v796 = vld [vmem:[%s755 + $0x4] sm:$0xf]
        %v797 = vsel %vm636, %v792, %v796
        %798 = vst [vmem:[%s755 + $0x4] sm:$0xf] %v797
      $region48: #{upsample_block.1} parent=35 // pred_fallthru
        _
      %p799 = scmp.eq.s32.totalorder %s21, 1
      // Predicated region
      $region49: #{upsample_block.1} parent=35 // pred_check
        %p800 = pneg %p799
      $region50: #{upsample_block.1} parent=35 // pred_check_branch
        %802 = sbr.rel (%p800) target = $region52
      $region51: #{upsample_block.1} parent=35 // pred_region
        %s803 = scalar_lea.vmem [#allocation2], 72
        %vm804 = vcmask 93184
        %805 = vst.msk [vmem:[%s803] sm:$0xf] %vm804, 0
        %806 = vst.msk [vmem:[%s803 + $0x4] sm:$0xf] %vm804, 0
      $region52: #{upsample_block.1} parent=35 // pred_fallthru
        _
      %vm807 = vcmask 24576
      %vm808 = vmand %vm807, %vm327
      %v809 = vld [vmem:[#allocation2] sm:$0x1]
      %v810 = vsel %vm808, 0, %v809
      %811 = vst [vmem:[#allocation2] sm:$0x1] %v810
      %v812 = vld [vmem:[#allocation2 + $0x8] sm:$0x1]
      %v813 = vsel %vm808, 0, %v812
      %814 = vst [vmem:[#allocation2 + $0x8] sm:$0x1] %v813
      %v815 = vld [vmem:[#allocation2 + $0x10] sm:$0x1]
      %v816 = vsel %vm808, 0, %v815
      %817 = vst [vmem:[#allocation2 + $0x10] sm:$0x1] %v816
      %v818 = vld [vmem:[#allocation2 + $0x18] sm:$0x1]
      %v819 = vsel %vm808, 0, %v818
      %820 = vst [vmem:[#allocation2 + $0x18] sm:$0x1] %v819
      %v821 = vld [vmem:[#allocation2 + $0x20] sm:$0x1]
      %v822 = vsel %vm808, 0, %v821
      %823 = vst [vmem:[#allocation2 + $0x20] sm:$0x1] %v822
      %v824 = vld [vmem:[#allocation2 + $0x28] sm:$0x1]
      %v825 = vsel %vm808, 0, %v824
      %826 = vst [vmem:[#allocation2 + $0x28] sm:$0x1] %v825
      %v827 = vld [vmem:[#allocation2 + $0x30] sm:$0x1]
      %v828 = vsel %vm808, 0, %v827
      %829 = vst [vmem:[#allocation2 + $0x30] sm:$0x1] %v828
      %v830 = vld [vmem:[#allocation2 + $0x38] sm:$0x1]
      %v831 = vsel %vm808, 0, %v830
      %832 = vst [vmem:[#allocation2 + $0x38] sm:$0x1] %v831
      %v833 = vld [vmem:[#allocation2 + $0x40] sm:$0x1]
      %v834 = vsel %vm808, 0, %v833
      %835 = vst [vmem:[#allocation2 + $0x40] sm:$0x1] %v834
      %v836 = vld [vmem:[#allocation2 + $0x48] sm:$0x1]
      %v837 = vsel %vm808, 0, %v836
      %838 = vst [vmem:[#allocation2 + $0x48] sm:$0x1] %v837
      %vm839 = vcmask 93251
      %vm840 = vsmask.f32 7950
      %vm841 = vmand %vm839, %vm840
      %v842 = vld [vmem:[#allocation2 + $0x4] sm:$0x8]
      %v843 = vsel %vm841, 0, %v842
      %844 = vst [vmem:[#allocation2 + $0x4] sm:$0x8] %v843
      %v845 = vld [vmem:[#allocation2 + $0xc] sm:$0x8]
      %v846 = vsel %vm841, 0, %v845
      %847 = vst [vmem:[#allocation2 + $0xc] sm:$0x8] %v846
      %v848 = vld [vmem:[#allocation2 + $0x14] sm:$0x8]
      %v849 = vsel %vm841, 0, %v848
      %850 = vst [vmem:[#allocation2 + $0x14] sm:$0x8] %v849
      %v851 = vld [vmem:[#allocation2 + $0x1c] sm:$0x8]
      %v852 = vsel %vm841, 0, %v851
      %853 = vst [vmem:[#allocation2 + $0x1c] sm:$0x8] %v852
      %v854 = vld [vmem:[#allocation2 + $0x24] sm:$0x8]
      %v855 = vsel %vm841, 0, %v854
      %856 = vst [vmem:[#allocation2 + $0x24] sm:$0x8] %v855
      %v857 = vld [vmem:[#allocation2 + $0x2c] sm:$0x8]
      %v858 = vsel %vm841, 0, %v857
      %859 = vst [vmem:[#allocation2 + $0x2c] sm:$0x8] %v858
      %v860 = vld [vmem:[#allocation2 + $0x34] sm:$0x8]
      %v861 = vsel %vm841, 0, %v860
      %862 = vst [vmem:[#allocation2 + $0x34] sm:$0x8] %v861
      %v863 = vld [vmem:[#allocation2 + $0x3c] sm:$0x8]
      %v864 = vsel %vm841, 0, %v863
      %865 = vst [vmem:[#allocation2 + $0x3c] sm:$0x8] %v864
      %v866 = vld [vmem:[#allocation2 + $0x44] sm:$0x8]
      %v867 = vsel %vm841, 0, %v866
      %868 = vst [vmem:[#allocation2 + $0x44] sm:$0x8] %v867
      %v869 = vld [vmem:[#allocation2 + $0x4c] sm:$0x8]
      %v870 = vsel %vm841, 0, %v869
      %871 = vst [vmem:[#allocation2 + $0x4c] sm:$0x8] %v870
      %v872 = vld [vmem:[#allocation2] sm:$0xf]
      %v873 = vld [vmem:[#allocation2 + $0x4] sm:$0xf]
      %v874 = vld [vmem:[#allocation2 + $0x8] sm:$0xf]
      %v875 = vld [vmem:[#allocation2 + $0xc] sm:$0xf]
      %v876 = vld [vmem:[#allocation2 + $0x10] sm:$0xf]
      %v877 = vld [vmem:[#allocation2 + $0x14] sm:$0xf]
      %v878 = vld [vmem:[#allocation2 + $0x18] sm:$0xf]
      %v879 = vld [vmem:[#allocation2 + $0x1c] sm:$0xf]
      %v880 = vld [vmem:[#allocation2 + $0x20] sm:$0xf]
      %v881 = vld [vmem:[#allocation2 + $0x24] sm:$0xf]
      %v882 = vld [vmem:[#allocation2 + $0x28] sm:$0xf]
      %v883 = vld [vmem:[#allocation2 + $0x2c] sm:$0xf]
      %v884 = vld [vmem:[#allocation2 + $0x30] sm:$0xf]
      %v885 = vld [vmem:[#allocation2 + $0x34] sm:$0xf]
      %v886 = vld [vmem:[#allocation2 + $0x38] sm:$0xf]
      %v887 = vld [vmem:[#allocation2 + $0x3c] sm:$0xf]
      %v888 = vld [vmem:[%s1] sm:$0xf]
      %v889 = vld [vmem:[%s1 + $0x4] sm:$0x3]
      %v906 = vunpack.c.l.b16 %v872
      %v907 = vunpack.c.l.b16 %v873
      %v908 = vunpack.c.l.b16 %v874
      %v909 = vunpack.c.l.b16 %v875
      %v910 = vunpack.c.l.b16 %v876
      %v911 = vunpack.c.l.b16 %v877
      %v912 = vunpack.c.l.b16 %v878
      %v913 = vunpack.c.l.b16 %v879
      %v914 = vunpack.c.l.b16 %v880
      %v915 = vunpack.c.l.b16 %v881
      %v916 = vunpack.c.l.b16 %v882
      %v917 = vunpack.c.l.b16 %v883
      %v918 = vunpack.c.l.b16 %v884
      %v919 = vunpack.c.l.b16 %v885
      %v920 = vunpack.c.l.b16 %v886
      %v921 = vunpack.c.l.b16 %v887
      %v922 = vpack.c.b16 %v907, %v906
      %v923 = vpack.c.b16 %v909, %v908
      %v924 = vpack.c.b16 %v911, %v910
      %v925 = vpack.c.b16 %v913, %v912
      %v926 = vpack.c.b16 %v915, %v914
      %v927 = vpack.c.b16 %v917, %v916
      %v928 = vpack.c.b16 %v919, %v918
      %v929 = vpack.c.b16 %v921, %v920
      %v932 = vunpack.c.l.b16 %v888
      %v933 = vunpack.c.l.b16 %v889
      %v934 = vpack.c.b16 %v933, %v932
      %vm935 = vcmask 97280
      %v937 = vsel %vm935, %v922, 0
      %v940 = vsel %vm935, %v923, 0
      %v943 = vsel %vm935, %v924, 0
      %v946 = vsel %vm935, %v925, 0
      %v949 = vsel %vm935, %v926, 0
      %v952 = vsel %vm935, %v927, 0
      %v955 = vsel %vm935, %v928, 0
      %v958 = vsel %vm935, %v929, 0
      %vm960 = vcmask 1045504
      %v962 = vsel %vm960, %v934, 0
      %964 = vmatprep.subr.bf16.mxu0 0
      %965 = vmatpush1.bf16.msra.mxu0 0
      %966 = vmatprep.subr.bf16.mxu0 0
      %967 = vmatpush1.bf16.msra.mxu0 0
      %968 = vmatprep.subr.bf16.mxu0 0
      %969 = vmatpush1.bf16.msra.mxu0 0
      %970 = vmatprep.subr.bf16.mxu0 0
      %971 = vmatpush1.bf16.msra.mxu0 0
      %972 = vmatprep.subr.bf16.mxu0 0
      %973 = vmatpush1.bf16.msra.mxu0 0
      %974 = vmatprep.subr.bf16.mxu0 0
      %975 = vmatpush1.bf16.msra.mxu0 0
      %976 = vmatprep.subr.bf16.mxu0 0
      %977 = vmatpush1.bf16.msra.mxu0 0
      %978 = vmatprep.subr.bf16.mxu0 0
      %979 = vmatpush1.bf16.msra.mxu0 %v962
      %980 = vmatprep.subr.bf16.mxu0 0
      %981 = vmatpush2.bf16.msra.mxu0 0
      %982 = vmatprep.subr.bf16.mxu0 0
      %983 = vmatpush2.bf16.msra.mxu0 0
      %984 = vmatprep.subr.bf16.mxu0 0
      %985 = vmatpush2.bf16.msra.mxu0 0
      %986 = vmatprep.subr.bf16.mxu0 0
      %987 = vmatpush2.bf16.msra.mxu0 0
      %988 = vmatprep.subr.bf16.mxu0 0
      %989 = vmatpush2.bf16.msra.mxu0 0
      %990 = vmatprep.subr.bf16.mxu0 0
      %991 = vmatpush2.bf16.msra.mxu0 0
      %992 = vmatprep.subr.bf16.mxu0 0
      %993 = vmatpush2.bf16.msra.mxu0 0
      %994 = vmatprep.subr.bf16.mxu0 0
      %995 = vmatpush2.bf16.msra.mxu0 0
      %996 = vmatprep.mubr.bf16.mxu0 0
      %997 = vmatmul.mubr.bf16.gmra.mxu0 %v937
      %v998 = vpop.f32.mrf.mxu0
      %v999 = vadd.f32 0.0, %v998
      %v1000 = vpop.f32.mrf.mxu0
      %v1001 = vpop.f32.mrf.mxu0
      %v1002 = vadd.f32 0.0, %v1001
      %v1003 = vpop.f32.mrf.mxu0
      %1004 = vmatprep.mubr.bf16.mxu0 0
      %1005 = vmatmul.mubr.bf16.gmra.mxu0 %v940
      %v1006 = vpop.f32.mrf.mxu0
      %v1007 = vadd.f32 0.0, %v1006
      %v1008 = vpop.f32.mrf.mxu0
      %v1009 = vpop.f32.mrf.mxu0
      %v1010 = vadd.f32 0.0, %v1009
      %v1011 = vpop.f32.mrf.mxu0
      %1012 = vmatprep.mubr.bf16.mxu0 0
      %1013 = vmatmul.mubr.bf16.gmra.mxu0 %v943
      %v1014 = vpop.f32.mrf.mxu0
      %v1015 = vadd.f32 0.0, %v1014
      %v1016 = vpop.f32.mrf.mxu0
      %v1017 = vpop.f32.mrf.mxu0
      %v1018 = vadd.f32 0.0, %v1017
      %v1019 = vpop.f32.mrf.mxu0
      %1020 = vmatprep.mubr.bf16.mxu0 0
      %1021 = vmatmul.mubr.bf16.gmra.mxu0 %v946
      %v1022 = vpop.f32.mrf.mxu0
      %v1023 = vadd.f32 0.0, %v1022
      %v1024 = vpop.f32.mrf.mxu0
      %v1025 = vpop.f32.mrf.mxu0
      %v1026 = vadd.f32 0.0, %v1025
      %v1027 = vpop.f32.mrf.mxu0
      %1028 = vmatprep.mubr.bf16.mxu0 0
      %1029 = vmatmul.mubr.bf16.gmra.mxu0 %v949
      %v1030 = vpop.f32.mrf.mxu0
      %v1031 = vadd.f32 0.0, %v1030
      %v1032 = vpop.f32.mrf.mxu0
      %v1033 = vpop.f32.mrf.mxu0
      %v1034 = vadd.f32 0.0, %v1033
      %v1035 = vpop.f32.mrf.mxu0
      %1036 = vmatprep.mubr.bf16.mxu0 0
      %1037 = vmatmul.mubr.bf16.gmra.mxu0 %v952
      %v1038 = vpop.f32.mrf.mxu0
      %v1039 = vadd.f32 0.0, %v1038
      %v1040 = vpop.f32.mrf.mxu0
      %v1041 = vpop.f32.mrf.mxu0
      %v1042 = vadd.f32 0.0, %v1041
      %v1043 = vpop.f32.mrf.mxu0
      %1044 = vmatprep.mubr.bf16.mxu0 0
      %1045 = vmatmul.mubr.bf16.gmra.mxu0 %v955
      %v1046 = vpop.f32.mrf.mxu0
      %v1047 = vadd.f32 0.0, %v1046
      %v1048 = vpop.f32.mrf.mxu0
      %v1049 = vpop.f32.mrf.mxu0
      %v1050 = vadd.f32 0.0, %v1049
      %v1051 = vpop.f32.mrf.mxu0
      %1052 = vmatprep.mubr.bf16.mxu0 0
      %1053 = vmatmul.mubr.bf16.gmra.mxu0 %v958
      %v1054 = vpop.f32.mrf.mxu0
      %v1055 = vadd.f32 0.0, %v1054
      %v1056 = vpop.f32.mrf.mxu0
      %v1057 = vpop.f32.mrf.mxu0
      %v1058 = vadd.f32 0.0, %v1057
      %v1059 = vpop.f32.mrf.mxu0
      %1060 = vdwg.mxu0
      %vm1061 = vcmask 130048
      %1062 = vst.msk [vmem:[#allocation3] sm:$0xff] %vm1061, %v999
      %1063 = vst.msk [vmem:[#allocation3 + $0x8] sm:$0xff] %vm1061, %v1002
      %1064 = vst.msk [vmem:[#allocation3 + $0x10] sm:$0xff] %vm1061, %v1007
      %1065 = vst.msk [vmem:[#allocation3 + $0x18] sm:$0xff] %vm1061, %v1010
      %1066 = vst.msk [vmem:[#allocation3 + $0x20] sm:$0xff] %vm1061, %v1015
      %1067 = vst.msk [vmem:[#allocation3 + $0x28] sm:$0xff] %vm1061, %v1018
      %1068 = vst.msk [vmem:[#allocation3 + $0x30] sm:$0xff] %vm1061, %v1023
      %1069 = vst.msk [vmem:[#allocation3 + $0x38] sm:$0xff] %vm1061, %v1026
      %1070 = vst.msk [vmem:[#allocation3 + $0x40] sm:$0xff] %vm1061, %v1031
      %1071 = vst.msk [vmem:[#allocation3 + $0x48] sm:$0xff] %vm1061, %v1034
      %1072 = vst.msk [vmem:[#allocation3 + $0x50] sm:$0xff] %vm1061, %v1039
      %1073 = vst.msk [vmem:[#allocation3 + $0x58] sm:$0xff] %vm1061, %v1042
      %1074 = vst.msk [vmem:[#allocation3 + $0x60] sm:$0xff] %vm1061, %v1047
      %1075 = vst.msk [vmem:[#allocation3 + $0x68] sm:$0xff] %vm1061, %v1050
      %1076 = vst.msk [vmem:[#allocation3 + $0x70] sm:$0xff] %vm1061, %v1055
      %1077 = vst.msk [vmem:[#allocation3 + $0x78] sm:$0xff] %vm1061, %v1058
      %v1078 = vld [vmem:[#allocation3] sm:$0xff]
      %v1079 = vld [vmem:[#allocation3 + $0x8] sm:$0xff]
      %v1080 = vld [vmem:[#allocation3 + $0x10] sm:$0xff]
      %v1081 = vld [vmem:[#allocation3 + $0x18] sm:$0xff]
      %v1082 = vld [vmem:[#allocation3 + $0x20] sm:$0xff]
      %v1083 = vld [vmem:[#allocation3 + $0x28] sm:$0xff]
      %v1084 = vld [vmem:[#allocation3 + $0x30] sm:$0xff]
      %v1085 = vld [vmem:[#allocation3 + $0x38] sm:$0xff]
      %v1086 = vld [vmem:[#allocation3 + $0x40] sm:$0xff]
      %v1087 = vld [vmem:[#allocation3 + $0x48] sm:$0xff]
      %v1088 = vld [vmem:[#allocation3 + $0x50] sm:$0xff]
      %v1089 = vld [vmem:[#allocation3 + $0x58] sm:$0xff]
      %v1090 = vld [vmem:[#allocation3 + $0x60] sm:$0xff]
      %v1091 = vld [vmem:[#allocation3 + $0x68] sm:$0xff]
      %v1092 = vld [vmem:[#allocation3 + $0x70] sm:$0xff]
      %v1093 = vld [vmem:[#allocation3 + $0x78] sm:$0xff]
      %v1094 = vld [vmem:[%s309] sm:$0xf]
      %v1095 = vld [vmem:[%s309 + $0x4] sm:$0xf]
      %v1096 = vld [vmem:[%s309 + $0x8] sm:$0xf]
      %v1097 = vld [vmem:[%s309 + $0xc] sm:$0xf]
      %v1098 = vld [vmem:[%s309 + $0x10] sm:$0xf]
      %v1099 = vld [vmem:[%s309 + $0x14] sm:$0xf]
      %v1100 = vld [vmem:[%s309 + $0x18] sm:$0xf]
      %v1101 = vld [vmem:[%s309 + $0x1c] sm:$0xf]
      %v1102 = vld [vmem:[%s309 + $0x20] sm:$0xf]
      %v1103 = vld [vmem:[%s309 + $0x24] sm:$0xf]
      %v1104 = vld [vmem:[%s309 + $0x28] sm:$0xf]
      %v1105 = vld [vmem:[%s309 + $0x2c] sm:$0xf]
      %v1106 = vld [vmem:[%s309 + $0x30] sm:$0xf]
      %v1107 = vld [vmem:[%s309 + $0x34] sm:$0xf]
      %v1108 = vld [vmem:[%s309 + $0x38] sm:$0xf]
      %v1109 = vld [vmem:[%s309 + $0x3c] sm:$0xf]
      %s1110 = scalar_lea.vmem %s1, 8
      %v1111 = vld [vmem:[%s1110] sm:$0xf]
      %v1112 = vld [vmem:[%s1110 + $0x4] sm:$0x3]
      %v1129 = vunpack.c.l.b16 %v1094
      %v1130 = vunpack.c.l.b16 %v1095
      %v1131 = vunpack.c.l.b16 %v1096
      %v1132 = vunpack.c.l.b16 %v1097
      %v1133 = vunpack.c.l.b16 %v1098
      %v1134 = vunpack.c.l.b16 %v1099
      %v1135 = vunpack.c.l.b16 %v1100
      %v1136 = vunpack.c.l.b16 %v1101
      %v1137 = vunpack.c.l.b16 %v1102
      %v1138 = vunpack.c.l.b16 %v1103
      %v1139 = vunpack.c.l.b16 %v1104
      %v1140 = vunpack.c.l.b16 %v1105
      %v1141 = vunpack.c.l.b16 %v1106
      %v1142 = vunpack.c.l.b16 %v1107
      %v1143 = vunpack.c.l.b16 %v1108
      %v1144 = vunpack.c.l.b16 %v1109
      %v1145 = vpack.c.b16 %v1130, %v1129
      %v1146 = vpack.c.b16 %v1132, %v1131
      %v1147 = vpack.c.b16 %v1134, %v1133
      %v1148 = vpack.c.b16 %v1136, %v1135
      %v1149 = vpack.c.b16 %v1138, %v1137
      %v1150 = vpack.c.b16 %v1140, %v1139
      %v1151 = vpack.c.b16 %v1142, %v1141
      %v1152 = vpack.c.b16 %v1144, %v1143
      %v1155 = vunpack.c.l.b16 %v1111
      %v1156 = vunpack.c.l.b16 %v1112
      %v1157 = vpack.c.b16 %v1156, %v1155
      %v1159 = vsel %vm935, %v1145, 0
      %v1162 = vsel %vm935, %v1146, 0
      %v1165 = vsel %vm935, %v1147, 0
      %v1168 = vsel %vm935, %v1148, 0
      %v1171 = vsel %vm935, %v1149, 0
      %v1174 = vsel %vm935, %v1150, 0
      %v1177 = vsel %vm935, %v1151, 0
      %v1180 = vsel %vm935, %v1152, 0
      %v1183 = vsel %vm960, %v1157, 0
      %1185 = vmatprep.subr.bf16.mxu0 0
      %1186 = vmatpush1.bf16.msra.mxu0 0
      %1187 = vmatprep.subr.bf16.mxu0 0
      %1188 = vmatpush1.bf16.msra.mxu0 0
      %1189 = vmatprep.subr.bf16.mxu0 0
      %1190 = vmatpush1.bf16.msra.mxu0 0
      %1191 = vmatprep.subr.bf16.mxu0 0
      %1192 = vmatpush1.bf16.msra.mxu0 0
      %1193 = vmatprep.subr.bf16.mxu0 0
      %1194 = vmatpush1.bf16.msra.mxu0 0
      %1195 = vmatprep.subr.bf16.mxu0 0
      %1196 = vmatpush1.bf16.msra.mxu0 0
      %1197 = vmatprep.subr.bf16.mxu0 0
      %1198 = vmatpush1.bf16.msra.mxu0 0
      %1199 = vmatprep.subr.bf16.mxu0 0
      %1200 = vmatpush1.bf16.msra.mxu0 %v1183
      %1201 = vmatprep.subr.bf16.mxu0 0
      %1202 = vmatpush2.bf16.msra.mxu0 0
      %1203 = vmatprep.subr.bf16.mxu0 0
      %1204 = vmatpush2.bf16.msra.mxu0 0
      %1205 = vmatprep.subr.bf16.mxu0 0
      %1206 = vmatpush2.bf16.msra.mxu0 0
      %1207 = vmatprep.subr.bf16.mxu0 0
      %1208 = vmatpush2.bf16.msra.mxu0 0
      %1209 = vmatprep.subr.bf16.mxu0 0
      %1210 = vmatpush2.bf16.msra.mxu0 0
      %1211 = vmatprep.subr.bf16.mxu0 0
      %1212 = vmatpush2.bf16.msra.mxu0 0
      %1213 = vmatprep.subr.bf16.mxu0 0
      %1214 = vmatpush2.bf16.msra.mxu0 0
      %1215 = vmatprep.subr.bf16.mxu0 0
      %1216 = vmatpush2.bf16.msra.mxu0 0
      %1217 = vmatprep.mubr.bf16.mxu0 0
      %1218 = vmatmul.mubr.bf16.gmra.mxu0 %v1159
      %v1219 = vpop.f32.mrf.mxu0
      %v1220 = vadd.f32 0.0, %v1219
      %v1221 = vpop.f32.mrf.mxu0
      %v1222 = vpop.f32.mrf.mxu0
      %v1223 = vadd.f32 0.0, %v1222
      %v1224 = vpop.f32.mrf.mxu0
      %1225 = vmatprep.mubr.bf16.mxu0 0
      %1226 = vmatmul.mubr.bf16.gmra.mxu0 %v1162
      %v1227 = vpop.f32.mrf.mxu0
      %v1228 = vadd.f32 0.0, %v1227
      %v1229 = vpop.f32.mrf.mxu0
      %v1230 = vpop.f32.mrf.mxu0
      %v1231 = vadd.f32 0.0, %v1230
      %v1232 = vpop.f32.mrf.mxu0
      %1233 = vmatprep.mubr.bf16.mxu0 0
      %1234 = vmatmul.mubr.bf16.gmra.mxu0 %v1165
      %v1235 = vpop.f32.mrf.mxu0
      %v1236 = vadd.f32 0.0, %v1235
      %v1237 = vpop.f32.mrf.mxu0
      %v1238 = vpop.f32.mrf.mxu0
      %v1239 = vadd.f32 0.0, %v1238
      %v1240 = vpop.f32.mrf.mxu0
      %1241 = vmatprep.mubr.bf16.mxu0 0
      %1242 = vmatmul.mubr.bf16.gmra.mxu0 %v1168
      %v1243 = vpop.f32.mrf.mxu0
      %v1244 = vadd.f32 0.0, %v1243
      %v1245 = vpop.f32.mrf.mxu0
      %v1246 = vpop.f32.mrf.mxu0
      %v1247 = vadd.f32 0.0, %v1246
      %v1248 = vpop.f32.mrf.mxu0
      %1249 = vmatprep.mubr.bf16.mxu0 0
      %1250 = vmatmul.mubr.bf16.gmra.mxu0 %v1171
      %v1251 = vpop.f32.mrf.mxu0
      %v1252 = vadd.f32 0.0, %v1251
      %v1253 = vpop.f32.mrf.mxu0
      %v1254 = vpop.f32.mrf.mxu0
      %v1255 = vadd.f32 0.0, %v1254
      %v1256 = vpop.f32.mrf.mxu0
      %1257 = vmatprep.mubr.bf16.mxu0 0
      %1258 = vmatmul.mubr.bf16.gmra.mxu0 %v1174
      %v1259 = vpop.f32.mrf.mxu0
      %v1260 = vadd.f32 0.0, %v1259
      %v1261 = vpop.f32.mrf.mxu0
      %v1262 = vpop.f32.mrf.mxu0
      %v1263 = vadd.f32 0.0, %v1262
      %v1264 = vpop.f32.mrf.mxu0
      %1265 = vmatprep.mubr.bf16.mxu0 0
      %1266 = vmatmul.mubr.bf16.gmra.mxu0 %v1177
      %v1267 = vpop.f32.mrf.mxu0
      %v1268 = vadd.f32 0.0, %v1267
      %v1269 = vpop.f32.mrf.mxu0
      %v1270 = vpop.f32.mrf.mxu0
      %v1271 = vadd.f32 0.0, %v1270
      %v1272 = vpop.f32.mrf.mxu0
      %1273 = vmatprep.mubr.bf16.mxu0 0
      %1274 = vmatmul.mubr.bf16.gmra.mxu0 %v1180
      %v1275 = vpop.f32.mrf.mxu0
      %v1276 = vadd.f32 0.0, %v1275
      %v1277 = vpop.f32.mrf.mxu0
      %v1278 = vpop.f32.mrf.mxu0
      %v1279 = vadd.f32 0.0, %v1278
      %v1280 = vpop.f32.mrf.mxu0
      %1281 = vdwg.mxu0
      %v1282 = vadd.f32 %v1078, %v1220
      %v1283 = vadd.f32 %v1079, %v1223
      %v1284 = vadd.f32 %v1080, %v1228
      %v1285 = vadd.f32 %v1081, %v1231
      %v1286 = vadd.f32 %v1082, %v1236
      %v1287 = vadd.f32 %v1083, %v1239
      %v1288 = vadd.f32 %v1084, %v1244
      %v1289 = vadd.f32 %v1085, %v1247
      %v1290 = vadd.f32 %v1086, %v1252
      %v1291 = vadd.f32 %v1087, %v1255
      %v1292 = vadd.f32 %v1088, %v1260
      %v1293 = vadd.f32 %v1089, %v1263
      %v1294 = vadd.f32 %v1090, %v1268
      %v1295 = vadd.f32 %v1091, %v1271
      %v1296 = vadd.f32 %v1092, %v1276
      %v1297 = vadd.f32 %v1093, %v1279
      %1298 = vst.msk [vmem:[#allocation3] sm:$0xff] %vm1061, %v1282
      %1299 = vst.msk [vmem:[#allocation3 + $0x8] sm:$0xff] %vm1061, %v1283
      %1300 = vst.msk [vmem:[#allocation3 + $0x10] sm:$0xff] %vm1061, %v1284
      %1301 = vst.msk [vmem:[#allocation3 + $0x18] sm:$0xff] %vm1061, %v1285
      %1302 = vst.msk [vmem:[#allocation3 + $0x20] sm:$0xff] %vm1061, %v1286
      %1303 = vst.msk [vmem:[#allocation3 + $0x28] sm:$0xff] %vm1061, %v1287
      %1304 = vst.msk [vmem:[#allocation3 + $0x30] sm:$0xff] %vm1061, %v1288
      %1305 = vst.msk [vmem:[#allocation3 + $0x38] sm:$0xff] %vm1061, %v1289
      %1306 = vst.msk [vmem:[#allocation3 + $0x40] sm:$0xff] %vm1061, %v1290
      %1307 = vst.msk [vmem:[#allocation3 + $0x48] sm:$0xff] %vm1061, %v1291
      %1308 = vst.msk [vmem:[#allocation3 + $0x50] sm:$0xff] %vm1061, %v1292
      %1309 = vst.msk [vmem:[#allocation3 + $0x58] sm:$0xff] %vm1061, %v1293
      %1310 = vst.msk [vmem:[#allocation3 + $0x60] sm:$0xff] %vm1061, %v1294
      %1311 = vst.msk [vmem:[#allocation3 + $0x68] sm:$0xff] %vm1061, %v1295
      %1312 = vst.msk [vmem:[#allocation3 + $0x70] sm:$0xff] %vm1061, %v1296
      %1313 = vst.msk [vmem:[#allocation3 + $0x78] sm:$0xff] %vm1061, %v1297
      %v1314 = vld [vmem:[#allocation3] sm:$0xff]
      %v1315 = vld [vmem:[#allocation3 + $0x8] sm:$0xff]
      %v1316 = vld [vmem:[#allocation3 + $0x10] sm:$0xff]
      %v1317 = vld [vmem:[#allocation3 + $0x18] sm:$0xff]
      %v1318 = vld [vmem:[#allocation3 + $0x20] sm:$0xff]
      %v1319 = vld [vmem:[#allocation3 + $0x28] sm:$0xff]
      %v1320 = vld [vmem:[#allocation3 + $0x30] sm:$0xff]
      %v1321 = vld [vmem:[#allocation3 + $0x38] sm:$0xff]
      %v1322 = vld [vmem:[#allocation3 + $0x40] sm:$0xff]
      %v1323 = vld [vmem:[#allocation3 + $0x48] sm:$0xff]
      %v1324 = vld [vmem:[#allocation3 + $0x50] sm:$0xff]
      %v1325 = vld [vmem:[#allocation3 + $0x58] sm:$0xff]
      %v1326 = vld [vmem:[#allocation3 + $0x60] sm:$0xff]
      %v1327 = vld [vmem:[#allocation3 + $0x68] sm:$0xff]
      %v1328 = vld [vmem:[#allocation3 + $0x70] sm:$0xff]
      %v1329 = vld [vmem:[#allocation3 + $0x78] sm:$0xff]
      %s1330 = scalar_lea.vmem [#allocation2], 16
      %v1331 = vld [vmem:[%s1330] sm:$0xf]
      %v1332 = vld [vmem:[%s1330 + $0x4] sm:$0xf]
      %v1333 = vld [vmem:[%s1330 + $0x8] sm:$0xf]
      %v1334 = vld [vmem:[%s1330 + $0xc] sm:$0xf]
      %v1335 = vld [vmem:[%s1330 + $0x10] sm:$0xf]
      %v1336 = vld [vmem:[%s1330 + $0x14] sm:$0xf]
      %v1337 = vld [vmem:[%s1330 + $0x18] sm:$0xf]
      %v1338 = vld [vmem:[%s1330 + $0x1c] sm:$0xf]
      %v1339 = vld [vmem:[%s1330 + $0x20] sm:$0xf]
      %v1340 = vld [vmem:[%s1330 + $0x24] sm:$0xf]
      %v1341 = vld [vmem:[%s1330 + $0x28] sm:$0xf]
      %v1342 = vld [vmem:[%s1330 + $0x2c] sm:$0xf]
      %v1343 = vld [vmem:[%s1330 + $0x30] sm:$0xf]
      %v1344 = vld [vmem:[%s1330 + $0x34] sm:$0xf]
      %v1345 = vld [vmem:[%s1330 + $0x38] sm:$0xf]
      %v1346 = vld [vmem:[%s1330 + $0x3c] sm:$0xf]
      %s1347 = scalar_lea.vmem %s1, 16
      %v1348 = vld [vmem:[%s1347] sm:$0xf]
      %v1349 = vld [vmem:[%s1347 + $0x4] sm:$0x3]
      %v1366 = vunpack.c.l.b16 %v1331
      %v1367 = vunpack.c.l.b16 %v1332
      %v1368 = vunpack.c.l.b16 %v1333
      %v1369 = vunpack.c.l.b16 %v1334
      %v1370 = vunpack.c.l.b16 %v1335
      %v1371 = vunpack.c.l.b16 %v1336
      %v1372 = vunpack.c.l.b16 %v1337
      %v1373 = vunpack.c.l.b16 %v1338
      %v1374 = vunpack.c.l.b16 %v1339
      %v1375 = vunpack.c.l.b16 %v1340
      %v1376 = vunpack.c.l.b16 %v1341
      %v1377 = vunpack.c.l.b16 %v1342
      %v1378 = vunpack.c.l.b16 %v1343
      %v1379 = vunpack.c.l.b16 %v1344
      %v1380 = vunpack.c.l.b16 %v1345
      %v1381 = vunpack.c.l.b16 %v1346
      %v1382 = vpack.c.b16 %v1367, %v1366
      %v1383 = vpack.c.b16 %v1369, %v1368
      %v1384 = vpack.c.b16 %v1371, %v1370
      %v1385 = vpack.c.b16 %v1373, %v1372
      %v1386 = vpack.c.b16 %v1375, %v1374
      %v1387 = vpack.c.b16 %v1377, %v1376
      %v1388 = vpack.c.b16 %v1379, %v1378
      %v1389 = vpack.c.b16 %v1381, %v1380
      %v1392 = vunpack.c.l.b16 %v1348
      %v1393 = vunpack.c.l.b16 %v1349
      %v1394 = vpack.c.b16 %v1393, %v1392
      %v1396 = vsel %vm935, %v1382, 0
      %v1399 = vsel %vm935, %v1383, 0
      %v1402 = vsel %vm935, %v1384, 0
      %v1405 = vsel %vm935, %v1385, 0
      %v1408 = vsel %vm935, %v1386, 0
      %v1411 = vsel %vm935, %v1387, 0
      %v1414 = vsel %vm935, %v1388, 0
      %v1417 = vsel %vm935, %v1389, 0
      %v1420 = vsel %vm960, %v1394, 0
      %1422 = vmatprep.subr.bf16.mxu0 0
      %1423 = vmatpush1.bf16.msra.mxu0 0
      %1424 = vmatprep.subr.bf16.mxu0 0
      %1425 = vmatpush1.bf16.msra.mxu0 0
      %1426 = vmatprep.subr.bf16.mxu0 0
      %1427 = vmatpush1.bf16.msra.mxu0 0
      %1428 = vmatprep.subr.bf16.mxu0 0
      %1429 = vmatpush1.bf16.msra.mxu0 0
      %1430 = vmatprep.subr.bf16.mxu0 0
      %1431 = vmatpush1.bf16.msra.mxu0 0
      %1432 = vmatprep.subr.bf16.mxu0 0
      %1433 = vmatpush1.bf16.msra.mxu0 0
      %1434 = vmatprep.subr.bf16.mxu0 0
      %1435 = vmatpush1.bf16.msra.mxu0 0
      %1436 = vmatprep.subr.bf16.mxu0 0
      %1437 = vmatpush1.bf16.msra.mxu0 %v1420
      %1438 = vmatprep.subr.bf16.mxu0 0
      %1439 = vmatpush2.bf16.msra.mxu0 0
      %1440 = vmatprep.subr.bf16.mxu0 0
      %1441 = vmatpush2.bf16.msra.mxu0 0
      %1442 = vmatprep.subr.bf16.mxu0 0
      %1443 = vmatpush2.bf16.msra.mxu0 0
      %1444 = vmatprep.subr.bf16.mxu0 0
      %1445 = vmatpush2.bf16.msra.mxu0 0
      %1446 = vmatprep.subr.bf16.mxu0 0
      %1447 = vmatpush2.bf16.msra.mxu0 0
      %1448 = vmatprep.subr.bf16.mxu0 0
      %1449 = vmatpush2.bf16.msra.mxu0 0
      %1450 = vmatprep.subr.bf16.mxu0 0
      %1451 = vmatpush2.bf16.msra.mxu0 0
      %1452 = vmatprep.subr.bf16.mxu0 0
      %1453 = vmatpush2.bf16.msra.mxu0 0
      %1454 = vmatprep.mubr.bf16.mxu0 0
      %1455 = vmatmul.mubr.bf16.gmra.mxu0 %v1396
      %v1456 = vpop.f32.mrf.mxu0
      %v1457 = vadd.f32 0.0, %v1456
      %v1458 = vpop.f32.mrf.mxu0
      %v1459 = vpop.f32.mrf.mxu0
      %v1460 = vadd.f32 0.0, %v1459
      %v1461 = vpop.f32.mrf.mxu0
      %1462 = vmatprep.mubr.bf16.mxu0 0
      %1463 = vmatmul.mubr.bf16.gmra.mxu0 %v1399
      %v1464 = vpop.f32.mrf.mxu0
      %v1465 = vadd.f32 0.0, %v1464
      %v1466 = vpop.f32.mrf.mxu0
      %v1467 = vpop.f32.mrf.mxu0
      %v1468 = vadd.f32 0.0, %v1467
      %v1469 = vpop.f32.mrf.mxu0
      %1470 = vmatprep.mubr.bf16.mxu0 0
      %1471 = vmatmul.mubr.bf16.gmra.mxu0 %v1402
      %v1472 = vpop.f32.mrf.mxu0
      %v1473 = vadd.f32 0.0, %v1472
      %v1474 = vpop.f32.mrf.mxu0
      %v1475 = vpop.f32.mrf.mxu0
      %v1476 = vadd.f32 0.0, %v1475
      %v1477 = vpop.f32.mrf.mxu0
      %1478 = vmatprep.mubr.bf16.mxu0 0
      %1479 = vmatmul.mubr.bf16.gmra.mxu0 %v1405
      %v1480 = vpop.f32.mrf.mxu0
      %v1481 = vadd.f32 0.0, %v1480
      %v1482 = vpop.f32.mrf.mxu0
      %v1483 = vpop.f32.mrf.mxu0
      %v1484 = vadd.f32 0.0, %v1483
      %v1485 = vpop.f32.mrf.mxu0
      %1486 = vmatprep.mubr.bf16.mxu0 0
      %1487 = vmatmul.mubr.bf16.gmra.mxu0 %v1408
      %v1488 = vpop.f32.mrf.mxu0
      %v1489 = vadd.f32 0.0, %v1488
      %v1490 = vpop.f32.mrf.mxu0
      %v1491 = vpop.f32.mrf.mxu0
      %v1492 = vadd.f32 0.0, %v1491
      %v1493 = vpop.f32.mrf.mxu0
      %1494 = vmatprep.mubr.bf16.mxu0 0
      %1495 = vmatmul.mubr.bf16.gmra.mxu0 %v1411
      %v1496 = vpop.f32.mrf.mxu0
      %v1497 = vadd.f32 0.0, %v1496
      %v1498 = vpop.f32.mrf.mxu0
      %v1499 = vpop.f32.mrf.mxu0
      %v1500 = vadd.f32 0.0, %v1499
      %v1501 = vpop.f32.mrf.mxu0
      %1502 = vmatprep.mubr.bf16.mxu0 0
      %1503 = vmatmul.mubr.bf16.gmra.mxu0 %v1414
      %v1504 = vpop.f32.mrf.mxu0
      %v1505 = vadd.f32 0.0, %v1504
      %v1506 = vpop.f32.mrf.mxu0
      %v1507 = vpop.f32.mrf.mxu0
      %v1508 = vadd.f32 0.0, %v1507
      %v1509 = vpop.f32.mrf.mxu0
      %1510 = vmatprep.mubr.bf16.mxu0 0
      %1511 = vmatmul.mubr.bf16.gmra.mxu0 %v1417
      %v1512 = vpop.f32.mrf.mxu0
      %v1513 = vadd.f32 0.0, %v1512
      %v1514 = vpop.f32.mrf.mxu0
      %v1515 = vpop.f32.mrf.mxu0
      %v1516 = vadd.f32 0.0, %v1515
      %v1517 = vpop.f32.mrf.mxu0
      %1518 = vdwg.mxu0
      %v1519 = vadd.f32 %v1314, %v1457
      %v1520 = vadd.f32 %v1315, %v1460
      %v1521 = vadd.f32 %v1316, %v1465
      %v1522 = vadd.f32 %v1317, %v1468
      %v1523 = vadd.f32 %v1318, %v1473
      %v1524 = vadd.f32 %v1319, %v1476
      %v1525 = vadd.f32 %v1320, %v1481
      %v1526 = vadd.f32 %v1321, %v1484
      %v1527 = vadd.f32 %v1322, %v1489
      %v1528 = vadd.f32 %v1323, %v1492
      %v1529 = vadd.f32 %v1324, %v1497
      %v1530 = vadd.f32 %v1325, %v1500
      %v1531 = vadd.f32 %v1326, %v1505
      %v1532 = vadd.f32 %v1327, %v1508
      %v1533 = vadd.f32 %v1328, %v1513
      %v1534 = vadd.f32 %v1329, %v1516
      %1535 = vst.msk [vmem:[#allocation3] sm:$0xff] %vm1061, %v1519
      %1536 = vst.msk [vmem:[#allocation3 + $0x8] sm:$0xff] %vm1061, %v1520
      %1537 = vst.msk [vmem:[#allocation3 + $0x10] sm:$0xff] %vm1061, %v1521
      %1538 = vst.msk [vmem:[#allocation3 + $0x18] sm:$0xff] %vm1061, %v1522
      %1539 = vst.msk [vmem:[#allocation3 + $0x20] sm:$0xff] %vm1061, %v1523
      %1540 = vst.msk [vmem:[#allocation3 + $0x28] sm:$0xff] %vm1061, %v1524
      %1541 = vst.msk [vmem:[#allocation3 + $0x30] sm:$0xff] %vm1061, %v1525
      %1542 = vst.msk [vmem:[#allocation3 + $0x38] sm:$0xff] %vm1061, %v1526
      %1543 = vst.msk [vmem:[#allocation3 + $0x40] sm:$0xff] %vm1061, %v1527
      %1544 = vst.msk [vmem:[#allocation3 + $0x48] sm:$0xff] %vm1061, %v1528
      %1545 = vst.msk [vmem:[#allocation3 + $0x50] sm:$0xff] %vm1061, %v1529
      %1546 = vst.msk [vmem:[#allocation3 + $0x58] sm:$0xff] %vm1061, %v1530
      %1547 = vst.msk [vmem:[#allocation3 + $0x60] sm:$0xff] %vm1061, %v1531
      %1548 = vst.msk [vmem:[#allocation3 + $0x68] sm:$0xff] %vm1061, %v1532
      %1549 = vst.msk [vmem:[#allocation3 + $0x70] sm:$0xff] %vm1061, %v1533
      %1550 = vst.msk [vmem:[#allocation3 + $0x78] sm:$0xff] %vm1061, %v1534
      %s1551 = sld [smem:[#allocation4]]
      %v1552 = vld [vmem:[#allocation3] sm:$0xff]
      %v1553 = vld [vmem:[#allocation3 + $0x8] sm:$0xff]
      %v1554 = vld [vmem:[#allocation3 + $0x10] sm:$0xff]
      %v1555 = vld [vmem:[#allocation3 + $0x18] sm:$0xff]
      %v1556 = vld [vmem:[#allocation3 + $0x20] sm:$0xff]
      %v1557 = vld [vmem:[#allocation3 + $0x28] sm:$0xff]
      %v1558 = vld [vmem:[#allocation3 + $0x30] sm:$0xff]
      %v1559 = vld [vmem:[#allocation3 + $0x38] sm:$0xff]
      %v1560 = vld [vmem:[#allocation3 + $0x40] sm:$0xff]
      %v1561 = vld [vmem:[#allocation3 + $0x48] sm:$0xff]
      %v1562 = vld [vmem:[#allocation3 + $0x50] sm:$0xff]
      %v1563 = vld [vmem:[#allocation3 + $0x58] sm:$0xff]
      %v1564 = vld [vmem:[#allocation3 + $0x60] sm:$0xff]
      %v1565 = vld [vmem:[#allocation3 + $0x68] sm:$0xff]
      %v1566 = vld [vmem:[#allocation3 + $0x70] sm:$0xff]
      %v1567 = vld [vmem:[#allocation3 + $0x78] sm:$0xff]
      %v1568 = vld [vmem:[%s2] sm:$0x1]
      %v1570 = vlaneseq
      %v1571 = vshrl.u32 %v1570, 7
      %v1572 = vsub.s32 0, %v1571
      %v1573 = vrot.slane %v1568, %v1572
      %v1575 = vadd.f32 %v1552, %v1573
      %v1576 = vadd.f32 %v1553, %v1573
      %v1577 = vadd.f32 %v1554, %v1573
      %v1578 = vadd.f32 %v1555, %v1573
      %v1579 = vadd.f32 %v1556, %v1573
      %v1580 = vadd.f32 %v1557, %v1573
      %v1581 = vadd.f32 %v1558, %v1573
      %v1582 = vadd.f32 %v1559, %v1573
      %v1583 = vadd.f32 %v1560, %v1573
      %v1584 = vadd.f32 %v1561, %v1573
      %v1585 = vadd.f32 %v1562, %v1573
      %v1586 = vadd.f32 %v1563, %v1573
      %v1587 = vadd.f32 %v1564, %v1573
      %v1588 = vadd.f32 %v1565, %v1573
      %v1589 = vadd.f32 %v1566, %v1573
      %v1590 = vadd.f32 %v1567, %v1573
      %vm1591 = vcmp.ge.f32.partialorder %v1575, 0.0
      %vm1592 = vcmp.ge.f32.partialorder %v1576, 0.0
      %vm1593 = vcmp.ge.f32.partialorder %v1577, 0.0
      %vm1594 = vcmp.ge.f32.partialorder %v1578, 0.0
      %vm1595 = vcmp.ge.f32.partialorder %v1579, 0.0
      %vm1596 = vcmp.ge.f32.partialorder %v1580, 0.0
      %vm1597 = vcmp.ge.f32.partialorder %v1581, 0.0
      %vm1598 = vcmp.ge.f32.partialorder %v1582, 0.0
      %vm1599 = vcmp.ge.f32.partialorder %v1583, 0.0
      %vm1600 = vcmp.ge.f32.partialorder %v1584, 0.0
      %vm1601 = vcmp.ge.f32.partialorder %v1585, 0.0
      %vm1602 = vcmp.ge.f32.partialorder %v1586, 0.0
      %vm1603 = vcmp.ge.f32.partialorder %v1587, 0.0
      %vm1604 = vcmp.ge.f32.partialorder %v1588, 0.0
      %vm1605 = vcmp.ge.f32.partialorder %v1589, 0.0
      %vm1606 = vcmp.ge.f32.partialorder %v1590, 0.0
      %v1607 = vstv %s1551
      %v1608 = vmul.f32 %v1607, %v1575
      %v1609 = vmul.f32 %v1607, %v1576
      %v1610 = vmul.f32 %v1607, %v1577
      %v1611 = vmul.f32 %v1607, %v1578
      %v1612 = vmul.f32 %v1607, %v1579
      %v1613 = vmul.f32 %v1607, %v1580
      %v1614 = vmul.f32 %v1607, %v1581
      %v1615 = vmul.f32 %v1607, %v1582
      %v1616 = vmul.f32 %v1607, %v1583
      %v1617 = vmul.f32 %v1607, %v1584
      %v1618 = vmul.f32 %v1607, %v1585
      %v1619 = vmul.f32 %v1607, %v1586
      %v1620 = vmul.f32 %v1607, %v1587
      %v1621 = vmul.f32 %v1607, %v1588
      %v1622 = vmul.f32 %v1607, %v1589
      %v1623 = vmul.f32 %v1607, %v1590
      %v1624 = vsel %vm1591, %v1575, %v1608
      %v1625 = vsel %vm1592, %v1576, %v1609
      %v1626 = vsel %vm1593, %v1577, %v1610
      %v1627 = vsel %vm1594, %v1578, %v1611
      %v1628 = vsel %vm1595, %v1579, %v1612
      %v1629 = vsel %vm1596, %v1580, %v1613
      %v1630 = vsel %vm1597, %v1581, %v1614
      %v1631 = vsel %vm1598, %v1582, %v1615
      %v1632 = vsel %vm1599, %v1583, %v1616
      %v1633 = vsel %vm1600, %v1584, %v1617
      %v1634 = vsel %vm1601, %v1585, %v1618
      %v1635 = vsel %vm1602, %v1586, %v1619
      %v1636 = vsel %vm1603, %v1587, %v1620
      %v1637 = vsel %vm1604, %v1588, %v1621
      %v1638 = vsel %vm1605, %v1589, %v1622
      %v1639 = vsel %vm1606, %v1590, %v1623
      %v1640 = vpack.c.bf16 %v1625, %v1624
      %v1641 = vpack.c.bf16 %v1627, %v1626
      %v1642 = vpack.c.bf16 %v1629, %v1628
      %v1643 = vpack.c.bf16 %v1631, %v1630
      %v1644 = vpack.c.bf16 %v1633, %v1632
      %v1645 = vpack.c.bf16 %v1635, %v1634
      %v1646 = vpack.c.bf16 %v1637, %v1636
      %v1647 = vpack.c.bf16 %v1639, %v1638
      %v1656 = vunpack.c.l.b16 %v1640
      %v1657 = vunpack.c.h.b16 %v1640
      %v1658 = vunpack.c.l.b16 %v1641
      %v1659 = vunpack.c.h.b16 %v1641
      %v1660 = vunpack.c.l.b16 %v1642
      %v1661 = vunpack.c.h.b16 %v1642
      %v1662 = vunpack.c.l.b16 %v1643
      %v1663 = vunpack.c.h.b16 %v1643
      %v1664 = vunpack.c.l.b16 %v1644
      %v1665 = vunpack.c.h.b16 %v1644
      %v1666 = vunpack.c.l.b16 %v1645
      %v1667 = vunpack.c.h.b16 %v1645
      %v1668 = vunpack.c.l.b16 %v1646
      %v1669 = vunpack.c.h.b16 %v1646
      %v1670 = vunpack.c.l.b16 %v1647
      %v1671 = vunpack.c.h.b16 %v1647
      %v1672 = vpack.c.b16 %v1656, %v1656
      %v1673 = vpack.c.b16 %v1657, %v1657
      %v1674 = vpack.c.b16 %v1658, %v1658
      %v1675 = vpack.c.b16 %v1659, %v1659
      %v1676 = vpack.c.b16 %v1660, %v1660
      %v1677 = vpack.c.b16 %v1661, %v1661
      %v1678 = vpack.c.b16 %v1662, %v1662
      %v1679 = vpack.c.b16 %v1663, %v1663
      %v1680 = vpack.c.b16 %v1664, %v1664
      %v1681 = vpack.c.b16 %v1665, %v1665
      %v1682 = vpack.c.b16 %v1666, %v1666
      %v1683 = vpack.c.b16 %v1667, %v1667
      %v1684 = vpack.c.b16 %v1668, %v1668
      %v1685 = vpack.c.b16 %v1669, %v1669
      %v1686 = vpack.c.b16 %v1670, %v1670
      %v1687 = vpack.c.b16 %v1671, %v1671
      %vm1704 = vcmask 60416
      %1705 = vst.msk [vmem:[%s222] sm:$0xf] %vm1704, %v1672
      %1706 = vst.msk [vmem:[%s222 + $0x4] sm:$0xf] %vm1704, %v1673
      %1707 = vst.msk [vmem:[%s222 + $0x10] sm:$0xf] %vm1704, %v1674
      %1708 = vst.msk [vmem:[%s222 + $0x14] sm:$0xf] %vm1704, %v1675
      %1709 = vst.msk [vmem:[%s222 + $0x20] sm:$0xf] %vm1704, %v1676
      %1710 = vst.msk [vmem:[%s222 + $0x24] sm:$0xf] %vm1704, %v1677
      %1711 = vst.msk [vmem:[%s222 + $0x30] sm:$0xf] %vm1704, %v1678
      %1712 = vst.msk [vmem:[%s222 + $0x34] sm:$0xf] %vm1704, %v1679
      %1713 = vst.msk [vmem:[%s222 + $0x40] sm:$0xf] %vm1704, %v1680
      %1714 = vst.msk [vmem:[%s222 + $0x44] sm:$0xf] %vm1704, %v1681
      %1715 = vst.msk [vmem:[%s222 + $0x50] sm:$0xf] %vm1704, %v1682
      %1716 = vst.msk [vmem:[%s222 + $0x54] sm:$0xf] %vm1704, %v1683
      %1717 = vst.msk [vmem:[%s222 + $0x60] sm:$0xf] %vm1704, %v1684
      %1718 = vst.msk [vmem:[%s222 + $0x64] sm:$0xf] %vm1704, %v1685
      %1719 = vst.msk [vmem:[%s222 + $0x70] sm:$0xf] %vm1704, %v1686
      %1720 = vst.msk [vmem:[%s222 + $0x74] sm:$0xf] %vm1704, %v1687
      %v1721 = vld [vmem:[#allocation3] sm:$0xff]
      %v1722 = vld [vmem:[#allocation3 + $0x8] sm:$0xff]
      %v1723 = vld [vmem:[#allocation3 + $0x10] sm:$0xff]
      %v1724 = vld [vmem:[#allocation3 + $0x18] sm:$0xff]
      %v1725 = vld [vmem:[#allocation3 + $0x20] sm:$0xff]
      %v1726 = vld [vmem:[#allocation3 + $0x28] sm:$0xff]
      %v1727 = vld [vmem:[#allocation3 + $0x30] sm:$0xff]
      %v1728 = vld [vmem:[#allocation3 + $0x38] sm:$0xff]
      %v1729 = vld [vmem:[#allocation3 + $0x40] sm:$0xff]
      %v1730 = vld [vmem:[#allocation3 + $0x48] sm:$0xff]
      %v1731 = vld [vmem:[#allocation3 + $0x50] sm:$0xff]
      %v1732 = vld [vmem:[#allocation3 + $0x58] sm:$0xff]
      %v1733 = vld [vmem:[#allocation3 + $0x60] sm:$0xff]
      %v1734 = vld [vmem:[#allocation3 + $0x68] sm:$0xff]
      %v1735 = vld [vmem:[#allocation3 + $0x70] sm:$0xff]
      %v1736 = vld [vmem:[#allocation3 + $0x78] sm:$0xff]
      %v1737 = vld [vmem:[%s2] sm:$0x1]
      %v1739 = vlaneseq
      %v1740 = vshrl.u32 %v1739, 7
      %v1741 = vsub.s32 0, %v1740
      %v1742 = vrot.slane %v1737, %v1741
      %v1744 = vadd.f32 %v1721, %v1742
      %v1745 = vadd.f32 %v1722, %v1742
      %v1746 = vadd.f32 %v1723, %v1742
      %v1747 = vadd.f32 %v1724, %v1742
      %v1748 = vadd.f32 %v1725, %v1742
      %v1749 = vadd.f32 %v1726, %v1742
      %v1750 = vadd.f32 %v1727, %v1742
      %v1751 = vadd.f32 %v1728, %v1742
      %v1752 = vadd.f32 %v1729, %v1742
      %v1753 = vadd.f32 %v1730, %v1742
      %v1754 = vadd.f32 %v1731, %v1742
      %v1755 = vadd.f32 %v1732, %v1742
      %v1756 = vadd.f32 %v1733, %v1742
      %v1757 = vadd.f32 %v1734, %v1742
      %v1758 = vadd.f32 %v1735, %v1742
      %v1759 = vadd.f32 %v1736, %v1742
      %vm1760 = vcmp.ge.f32.partialorder %v1744, 0.0
      %vm1761 = vcmp.ge.f32.partialorder %v1745, 0.0
      %vm1762 = vcmp.ge.f32.partialorder %v1746, 0.0
      %vm1763 = vcmp.ge.f32.partialorder %v1747, 0.0
      %vm1764 = vcmp.ge.f32.partialorder %v1748, 0.0
      %vm1765 = vcmp.ge.f32.partialorder %v1749, 0.0
      %vm1766 = vcmp.ge.f32.partialorder %v1750, 0.0
      %vm1767 = vcmp.ge.f32.partialorder %v1751, 0.0
      %vm1768 = vcmp.ge.f32.partialorder %v1752, 0.0
      %vm1769 = vcmp.ge.f32.partialorder %v1753, 0.0
      %vm1770 = vcmp.ge.f32.partialorder %v1754, 0.0
      %vm1771 = vcmp.ge.f32.partialorder %v1755, 0.0
      %vm1772 = vcmp.ge.f32.partialorder %v1756, 0.0
      %vm1773 = vcmp.ge.f32.partialorder %v1757, 0.0
      %vm1774 = vcmp.ge.f32.partialorder %v1758, 0.0
      %vm1775 = vcmp.ge.f32.partialorder %v1759, 0.0
      %v1776 = vmul.f32 %v1607, %v1744
      %v1777 = vmul.f32 %v1607, %v1745
      %v1778 = vmul.f32 %v1607, %v1746
      %v1779 = vmul.f32 %v1607, %v1747
      %v1780 = vmul.f32 %v1607, %v1748
      %v1781 = vmul.f32 %v1607, %v1749
      %v1782 = vmul.f32 %v1607, %v1750
      %v1783 = vmul.f32 %v1607, %v1751
      %v1784 = vmul.f32 %v1607, %v1752
      %v1785 = vmul.f32 %v1607, %v1753
      %v1786 = vmul.f32 %v1607, %v1754
      %v1787 = vmul.f32 %v1607, %v1755
      %v1788 = vmul.f32 %v1607, %v1756
      %v1789 = vmul.f32 %v1607, %v1757
      %v1790 = vmul.f32 %v1607, %v1758
      %v1791 = vmul.f32 %v1607, %v1759
      %v1792 = vsel %vm1760, %v1744, %v1776
      %v1793 = vsel %vm1761, %v1745, %v1777
      %v1794 = vsel %vm1762, %v1746, %v1778
      %v1795 = vsel %vm1763, %v1747, %v1779
      %v1796 = vsel %vm1764, %v1748, %v1780
      %v1797 = vsel %vm1765, %v1749, %v1781
      %v1798 = vsel %vm1766, %v1750, %v1782
      %v1799 = vsel %vm1767, %v1751, %v1783
      %v1800 = vsel %vm1768, %v1752, %v1784
      %v1801 = vsel %vm1769, %v1753, %v1785
      %v1802 = vsel %vm1770, %v1754, %v1786
      %v1803 = vsel %vm1771, %v1755, %v1787
      %v1804 = vsel %vm1772, %v1756, %v1788
      %v1805 = vsel %vm1773, %v1757, %v1789
      %v1806 = vsel %vm1774, %v1758, %v1790
      %v1807 = vsel %vm1775, %v1759, %v1791
      %v1808 = vpack.c.bf16 %v1793, %v1792
      %v1809 = vpack.c.bf16 %v1795, %v1794
      %v1810 = vpack.c.bf16 %v1797, %v1796
      %v1811 = vpack.c.bf16 %v1799, %v1798
      %v1812 = vpack.c.bf16 %v1801, %v1800
      %v1813 = vpack.c.bf16 %v1803, %v1802
      %v1814 = vpack.c.bf16 %v1805, %v1804
      %v1815 = vpack.c.bf16 %v1807, %v1806
      %v1824 = vunpack.c.l.b16 %v1808
      %v1825 = vunpack.c.h.b16 %v1808
      %v1826 = vunpack.c.l.b16 %v1809
      %v1827 = vunpack.c.h.b16 %v1809
      %v1828 = vunpack.c.l.b16 %v1810
      %v1829 = vunpack.c.h.b16 %v1810
      %v1830 = vunpack.c.l.b16 %v1811
      %v1831 = vunpack.c.h.b16 %v1811
      %v1832 = vunpack.c.l.b16 %v1812
      %v1833 = vunpack.c.h.b16 %v1812
      %v1834 = vunpack.c.l.b16 %v1813
      %v1835 = vunpack.c.h.b16 %v1813
      %v1836 = vunpack.c.l.b16 %v1814
      %v1837 = vunpack.c.h.b16 %v1814
      %v1838 = vunpack.c.l.b16 %v1815
      %v1839 = vunpack.c.h.b16 %v1815
      %v1840 = vpack.c.b16 %v1824, %v1824
      %v1841 = vpack.c.b16 %v1825, %v1825
      %v1842 = vpack.c.b16 %v1826, %v1826
      %v1843 = vpack.c.b16 %v1827, %v1827
      %v1844 = vpack.c.b16 %v1828, %v1828
      %v1845 = vpack.c.b16 %v1829, %v1829
      %v1846 = vpack.c.b16 %v1830, %v1830
      %v1847 = vpack.c.b16 %v1831, %v1831
      %v1848 = vpack.c.b16 %v1832, %v1832
      %v1849 = vpack.c.b16 %v1833, %v1833
      %v1850 = vpack.c.b16 %v1834, %v1834
      %v1851 = vpack.c.b16 %v1835, %v1835
      %v1852 = vpack.c.b16 %v1836, %v1836
      %v1853 = vpack.c.b16 %v1837, %v1837
      %v1854 = vpack.c.b16 %v1838, %v1838
      %v1855 = vpack.c.b16 %v1839, %v1839
      %1856 = vrot.lane.b32.xlu0 %v1840, 120
      %v1857 = vpop.permute.xlu0 %1856
      %1858 = vrot.lane.b32.xlu0 %v1841, 120
      %v1859 = vpop.permute.xlu0 %1858
      %1860 = vrot.lane.b32.xlu0 %v1842, 120
      %v1861 = vpop.permute.xlu0 %1860
      %1862 = vrot.lane.b32.xlu0 %v1843, 120
      %v1863 = vpop.permute.xlu0 %1862
      %1864 = vrot.lane.b32.xlu0 %v1844, 120
      %v1865 = vpop.permute.xlu0 %1864
      %1866 = vrot.lane.b32.xlu0 %v1845, 120
      %v1867 = vpop.permute.xlu0 %1866
      %1868 = vrot.lane.b32.xlu0 %v1846, 120
      %v1869 = vpop.permute.xlu0 %1868
      %1870 = vrot.lane.b32.xlu0 %v1847, 120
      %v1871 = vpop.permute.xlu0 %1870
      %1872 = vrot.lane.b32.xlu0 %v1848, 120
      %v1873 = vpop.permute.xlu0 %1872
      %1874 = vrot.lane.b32.xlu0 %v1849, 120
      %v1875 = vpop.permute.xlu0 %1874
      %1876 = vrot.lane.b32.xlu0 %v1850, 120
      %v1877 = vpop.permute.xlu0 %1876
      %1878 = vrot.lane.b32.xlu0 %v1851, 120
      %v1879 = vpop.permute.xlu0 %1878
      %1880 = vrot.lane.b32.xlu0 %v1852, 120
      %v1881 = vpop.permute.xlu0 %1880
      %1882 = vrot.lane.b32.xlu0 %v1853, 120
      %v1883 = vpop.permute.xlu0 %1882
      %1884 = vrot.lane.b32.xlu0 %v1854, 120
      %v1885 = vpop.permute.xlu0 %1884
      %1886 = vrot.lane.b32.xlu0 %v1855, 120
      %v1887 = vpop.permute.xlu0 %1886
      %s1904 = scalar_lea.vmem %s222, 8
      %1905 = vst.msk [vmem:[%s1904] sm:$0xf] %vm1704, %v1857
      %1906 = vst.msk [vmem:[%s1904 + $0x4] sm:$0xf] %vm1704, %v1859
      %1907 = vst.msk [vmem:[%s1904 + $0x10] sm:$0xf] %vm1704, %v1861
      %1908 = vst.msk [vmem:[%s1904 + $0x14] sm:$0xf] %vm1704, %v1863
      %1909 = vst.msk [vmem:[%s1904 + $0x20] sm:$0xf] %vm1704, %v1865
      %1910 = vst.msk [vmem:[%s1904 + $0x24] sm:$0xf] %vm1704, %v1867
      %1911 = vst.msk [vmem:[%s1904 + $0x30] sm:$0xf] %vm1704, %v1869
      %1912 = vst.msk [vmem:[%s1904 + $0x34] sm:$0xf] %vm1704, %v1871
      %1913 = vst.msk [vmem:[%s1904 + $0x40] sm:$0xf] %vm1704, %v1873
      %1914 = vst.msk [vmem:[%s1904 + $0x44] sm:$0xf] %vm1704, %v1875
      %1915 = vst.msk [vmem:[%s1904 + $0x50] sm:$0xf] %vm1704, %v1877
      %1916 = vst.msk [vmem:[%s1904 + $0x54] sm:$0xf] %vm1704, %v1879
      %1917 = vst.msk [vmem:[%s1904 + $0x60] sm:$0xf] %vm1704, %v1881
      %1918 = vst.msk [vmem:[%s1904 + $0x64] sm:$0xf] %vm1704, %v1883
      %1919 = vst.msk [vmem:[%s1904 + $0x70] sm:$0xf] %vm1704, %v1885
      %1920 = vst.msk [vmem:[%s1904 + $0x74] sm:$0xf] %vm1704, %v1887
      %s1921 = smul.u32 8, %s21
      %p1922 = scmp.lt.s32.totalorder %s20, 1
      %s1923 = scalar_select %p1922, %s20, 1
      %p1924 = scmp.lt.s32.totalorder %s1921, 15
      %s1925 = scalar_select %p1924, %s1921, 15
      %s1926 = smul.addr %s1925, 4
      %s1927 = smul.addr %s1923, 64
      %s1928 = sadd.s32 %s1926, %s1927
      %s1929 = smul.addr %s1928, 4
      %s1930 = scalar_lea.vmem %s4, %s1929
      // Predicated region
      $region53: #{upsample_block.1} parent=35 // pred_check
        %p1931 = pneg %p137
      $region54: #{upsample_block.1} parent=35 // pred_check_branch
        %1933 = sbr.rel (%p1931) target = $region56
      $region55: #{upsample_block.1} parent=35 // pred_region
        %s1934 = smul.u32 8, %s21
      $region56: #{upsample_block.1} parent=35 // pred_fallthru
        _
    $region36: #{upsample_block.1} parent=5 // pred_fallthru
      _
    %p1935 = scmp.le.s32.totalorder 2, %s11
    // Predicated region
    $region57: #{upsample_block.1} parent=5 // pred_check
      %p1936 = pneg %p1935
    $region58: #{upsample_block.1} parent=5 // pred_check_branch
      %1938 = sbr.rel (%p1936) target = $region60
    $region59: #{upsample_block.1} parent=5 // pred_region
      %s1939 = ssub.s32 %s11, 2
      // Predicated region
      $region61: #{upsample_block.1} parent=59 // pred_check
        %p1940 = pneg %p143
      $region62: #{upsample_block.1} parent=59 // pred_check_branch
        %1942 = sbr.rel (%p1940) target = $region64
      $region63: #{upsample_block.1} parent=59 // pred_region
        %s1943 = smul.u32 8, %s23
        %p1944 = scmp.lt.s32.totalorder %s22, 1
        %s1945 = scalar_select %p1944, %s22, 1
        %p1946 = scmp.lt.s32.totalorder %s1943, 15
        %s1947 = scalar_select %p1946, %s1943, 15
        %s1948 = smul.addr %s1947, 4
        %s1949 = smul.addr %s1945, 64
        %s1950 = sadd.s32 %s1948, %s1949
        %s1951 = smul.addr %s1950, 4
        %s1952 = scalar_lea.vmem %s4, %s1951
      $region64: #{upsample_block.1} parent=59 // pred_fallthru
        _
    $region60: #{upsample_block.1} parent=5 // pred_fallthru
      _
  $region6: #{upsample_block.1} parent=0 // loop_footer
    %s15 = sadd.s32 1, %s11
  $region7: #{upsample_block.1} parent=0 // loop_footer_branch
    %10 = sbr.rel target = $region3
  $region8: #{upsample_block.1} parent=0 // loop_exit
    _

</llo_original>
